<compile_context>
chip_gen: v6e
topology: v6e:2x2x1
jax: 0.10.0
libtpu: 0.0.40
codegen_flags: <defaults>
</compile_context>

<pallas_src>
import jax
import jax.numpy as jnp
from jax.experimental import pallas as pl
from jax.experimental.pallas import tpu as pltpu


def make_afm_kernel(matmul_dtype=None):
    """matmul_dtype=None keeps f32 MXU inputs (exact vs ref); jnp.bfloat16 on v6e/v7x."""

    def mm(a, b):
        if matmul_dtype is not None:
            a = a.astype(matmul_dtype)
            b = b.astype(matmul_dtype)
        return jnp.dot(a, b, preferred_element_type=jnp.float32)

    def kernel(emb_ref, cont_ref,                      # batch-tiled activations
               gp_ref, gq_ref,                         # 0/1 pair-selection matrices (F*D, P*D)
               w1f_ref, b1f_ref,                       # folded (conti_embed @ mlp layer1) Linear(C, H1)
               w2_ref, b2_ref,                         # MLP layer 2 Linear(H1, H2)
               wa_blk_ref, ba_rep_ref,                 # block-diag attention Linear (P*D, P*A)
               wp_blk_ref, bp_rep_ref,                 # block-diag projection Linear (P*A, P)
               rep_ref, sum_ref,                       # (P, P*D) replicate / (P*D, D) pair-sum
               woh_ref, woa_ref, bo_ref,               # split final projection
               out_ref):
        emb = emb_ref[...]                                                  # (TB, F*D)

        # --- in-kernel pair expansion (exact 0/1 selection matmuls, lane-dense) ---
        p2 = mm(emb, gp_ref[...])                                           # (TB, P*D)
        q2 = mm(emb, gq_ref[...])                                           # (TB, P*D)
        inner = p2 * q2                                                     # (TB, P*D)

        # --- continuous MLP (layer1 already folded with the continuous embedding) ---
        h = jnp.maximum(mm(cont_ref[...], w1f_ref[...]) + b1f_ref[...], 0.0)  # (TB, H1)
        h = jnp.maximum(mm(h, w2_ref[...]) + b2_ref[...], 0.0)                # (TB, H2)

        # --- attention scores for ALL pairs in two matmuls (block-diagonal weights) ---
        s = jnp.maximum(mm(inner, wa_blk_ref[...]) + ba_rep_ref[...], 0.0)    # (TB, P*A)
        logits = mm(s, wp_blk_ref[...]) + bp_rep_ref[...]                     # (TB, P)

        # softmax over pairs (lane axis)
        m = jnp.max(logits, axis=1, keepdims=True)
        e = jnp.exp(logits - m)
        denom = jnp.sum(e, axis=1, keepdims=True)
        att = e * pl.reciprocal(denom, approx=True)                           # (TB, P)

        # attention-weighted sum over pairs -> (TB, D), two small contractions
        att_rep = mm(att, rep_ref[...])                                       # (TB, P*D)
        afm = mm(inner * att_rep, sum_ref[...])                               # (TB, D)

        # --- split final projection (no lane-axis concat) + sigmoid ---
        logit = mm(h, woh_ref[...]) + mm(afm, woa_ref[...]) + bo_ref[...]     # (TB, 1)
        out_ref[...] = pl.reciprocal(1.0 + jnp.exp(-logit), approx=True)

    return kernel


def afm_forward_pallas(cate_emb, cont, params, *, block_b=None, matmul_dtype=None):
    """cate_emb: (B, F, D) f32 gathered categorical embeddings; cont: (B, C) f32."""
    (wc, bc, w1, b1, w2, b2, wa, ba, wp, bp, wo, bo) = params
    B, F, D = cate_emb.shape
    C = cont.shape[1]
    P = F * (F - 1) // 2
    A = wa.shape[1]
    H2 = w2.shape[1]

    # static pair index lists (i < j)
    row, col = [], []
    for i in range(F - 1):
        for j in range(i + 1, F):
            row.append(i)
            col.append(j)
    row = jnp.array(row, jnp.int32)
    col = jnp.array(col, jnp.int32)

    # ---- constants built once in the wrapper (parameter prep / layout plumbing) ----
    eye_d = jnp.eye(D, dtype=jnp.float32)
    eye_p = jnp.eye(P, dtype=jnp.float32)
    sel_p = jax.nn.one_hot(row, F, dtype=jnp.float32).T            # (F, P)
    sel_q = jax.nn.one_hot(col, F, dtype=jnp.float32).T            # (F, P)
    gp = jnp.kron(sel_p, eye_d)                                    # (F*D, P*D) 0/1 selection
    gq = jnp.kron(sel_q, eye_d)                                    # (F*D, P*D)
    w1f = wc @ w1                                                  # (C, H1)  folded Linear
    b1f = bc @ w1 + b1                                             # (1, H1)
    wa_blk = jnp.kron(eye_p, wa)                                   # (P*D, P*A)
    ba_rep = jnp.tile(ba, (1, P))                                  # (1, P*A)
    wp_blk = jnp.kron(eye_p, wp)                                   # (P*A, P)
    bp_rep = jnp.tile(bp, (1, P))                                  # (1, P)
    rep_mat = jnp.kron(eye_p, jnp.ones((1, D), jnp.float32))       # (P, P*D)
    sum_mat = jnp.tile(eye_d, (P, 1))                              # (P*D, D)
    wo_h = wo[:H2]                                                 # (H2, 1)
    wo_a = wo[H2:]                                                 # (D, 1)

    # lane-dense embedding slab; pair expansion happens inside the kernel
    emb_flat = cate_emb.reshape(B, F * D)                          # (B, F*D)

    # batch tiling: bytes/row is now only F*D + C floats, so big tiles amortize the
    # ~0.35 us per-step overhead while staying far under the v7x 64 MiB VMEM.
    if block_b is None:
        block_b = max(8, min(B, 512))
    b_pad = ((B + block_b - 1) // block_b) * block_b
    if b_pad != B:
        pad = b_pad - B
        emb_flat = jnp.pad(emb_flat, ((0, pad), (0, 0)))
        cont = jnp.pad(cont, ((0, pad), (0, 0)))

    weights = (gp, gq, w1f, b1f, w2, b2, wa_blk, ba_rep, wp_blk, bp_rep,
               rep_mat, sum_mat, wo_h, wo_a, bo)

    def batch_spec(width):
        return pl.BlockSpec((block_b, width), lambda i: (i, 0))

    def full_spec(arr):
        return pl.BlockSpec(arr.shape, lambda i: (0, 0))

    out = pl.pallas_call(
        make_afm_kernel(matmul_dtype),
        out_shape=jax.ShapeDtypeStruct((b_pad, 1), jnp.float32),
        grid=(b_pad // block_b,),
        in_specs=[batch_spec(F * D), batch_spec(C)]
                 + [full_spec(w) for w in weights],
        out_specs=pl.BlockSpec((block_b, 1), lambda i: (i, 0)),
        compiler_params=pltpu.CompilerParams(
            dimension_semantics=("parallel",)),
    )(emb_flat, cont, *weights)
    return out[:B, 0]                                              # (B,)


def afm_forward_ref(cate_emb, cont, params):
    """Pure-JAX reference (mirrors the PyTorch forward in eval mode)."""
    (wc, bc, w1, b1, w2, b2, wa, ba, wp, bp, wo, bo) = params
    B, F, D = cate_emb.shape
    ce = cont @ wc + bc[0]
    h = jnp.maximum(ce @ w1 + b1[0], 0.0)
    h = jnp.maximum(h @ w2 + b2[0], 0.0)

    row, col = [], []
    for i in range(F - 1):
        for j in range(i + 1, F):
            row.append(i)
            col.append(j)
    p_ = cate_emb[:, jnp.array(row), :]
    q_ = cate_emb[:, jnp.array(col), :]
    inner = p_ * q_                                   # (B, P, D)
    scores = jnp.maximum(inner @ wa + ba[0], 0.0)     # (B, P, A)
    logits = scores @ wp + bp[0]                      # (B, P, 1)
    att = jax.nn.softmax(logits, axis=1)
    afm = jnp.sum(att * inner, axis=1)                # (B, D)

    feat = jnp.concatenate([h, afm], axis=-1)
    out = (feat @ wo + bo[0])[:, 0]
    return jax.nn.sigmoid(out)


if __name__ == "__main__":
    # small, module-consistent shapes
    field_dims = [10, 20, 30, 15, 25, 12, 8, 18]   # num_fields = 8
    B = 8
    F = len(field_dims)
    D = 16           # embed_dim
    C = 4            # continue_feature_num
    H1, H2 = 32, 16  # hiden_dims
    A = 8            # attn_size

    key = jax.random.PRNGKey(0)
    keys = jax.random.split(key, 16)

    # deterministic synthetic parameters
    vocab = int(sum(field_dims))
    emb_table = jax.random.normal(keys[0], (vocab, D), jnp.float32) * 0.1
    wc = jax.random.normal(keys[1], (C, D), jnp.float32) * 0.1
    bc = jax.random.normal(keys[2], (1, D), jnp.float32) * 0.1
    w1 = jax.random.normal(keys[3], (D, H1), jnp.float32) * 0.1
    b1 = jax.random.normal(keys[4], (1, H1), jnp.float32) * 0.1
    w2 = jax.random.normal(keys[5], (H1, H2), jnp.float32) * 0.1
    b2 = jax.random.normal(keys[6], (1, H2), jnp.float32) * 0.1
    wa = jax.random.normal(keys[7], (D, A), jnp.float32) * 0.1
    ba = jax.random.normal(keys[8], (1, A), jnp.float32) * 0.1
    wp = jax.random.normal(keys[9], (A, 1), jnp.float32) * 0.1
    bp = jax.random.normal(keys[10], (1, 1), jnp.float32) * 0.1
    wo = jax.random.normal(keys[11], (H2 + D, 1), jnp.float32) * 0.1
    bo = jax.random.normal(keys[12], (1, 1), jnp.float32) * 0.1
    params = (wc, bc, w1, b1, w2, b2, wa, ba, wp, bp, wo, bo)

    # deterministic inputs
    cate = jnp.stack(
        [jax.random.randint(jax.random.fold_in(keys[13], f), (B,), 0, fd)
         for f, fd in enumerate(field_dims)], axis=1).astype(jnp.int32)   # (B, F)
    cont = jax.random.normal(keys[14], (B, C), jnp.float32)               # (B, C)

    # FeaturesEmbedding: offset each field into the shared table, then gather (glue in JAX)
    offsets = jnp.concatenate(
        [jnp.zeros((1,), jnp.int32), jnp.cumsum(jnp.array(field_dims[:-1], jnp.int32))])
    cate_emb = emb_table[cate + offsets[None, :]]                         # (B, F, D)

    out = afm_forward_pallas(cate_emb, cont, params)
    out = jax.block_until_ready(out)

    ref = afm_forward_ref(cate_emb, cont, params)
    assert out.shape == (B,)
    # approx (EUP) reciprocals in softmax/sigmoid -> slightly looser tolerance
    assert jnp.allclose(out, ref, atol=2e-3, rtol=2e-3), (out, ref)
    print("KERNEL_OK")
</pallas_src>

<mosaic_0001>
module attributes {stable_mosaic.version = 11 : i64} {
  func.func @kernel(%arg0: i32, %arg1: memref<8x128xf32, #tpu.memory_space<vmem>>, %arg2: memref<8x4xf32, #tpu.memory_space<vmem>>, %arg3: memref<128x448xf32, #tpu.memory_space<vmem>>, %arg4: memref<128x448xf32, #tpu.memory_space<vmem>>, %arg5: memref<4x32xf32, #tpu.memory_space<vmem>>, %arg6: memref<1x32xf32, #tpu.memory_space<vmem>>, %arg7: memref<32x16xf32, #tpu.memory_space<vmem>>, %arg8: memref<1x16xf32, #tpu.memory_space<vmem>>, %arg9: memref<448x224xf32, #tpu.memory_space<vmem>>, %arg10: memref<1x224xf32, #tpu.memory_space<vmem>>, %arg11: memref<224x28xf32, #tpu.memory_space<vmem>>, %arg12: memref<1x28xf32, #tpu.memory_space<vmem>>, %arg13: memref<28x448xf32, #tpu.memory_space<vmem>>, %arg14: memref<448x16xf32, #tpu.memory_space<vmem>>, %arg15: memref<16x1xf32, #tpu.memory_space<vmem>>, %arg16: memref<16x1xf32, #tpu.memory_space<vmem>>, %arg17: memref<1x1xf32, #tpu.memory_space<vmem>>, %arg18: memref<8x1xf32, #tpu.memory_space<vmem>>) attributes {dimension_semantics = [#tpu.dimension_semantics<parallel>], iteration_bounds = array<i64: 1>, scalar_prefetch = 0 : i64, scratch_operands = 0 : i64, tpu.core_type = #tpu.core_type<tc>, window_params = [{transform_indices = @transform_0, window_bounds = array<i64: 8, 128>}, {transform_indices = @transform_1, window_bounds = array<i64: 8, 4>}, {pipeline_mode = #tpu.pipeline_mode<synchronous>, transform_indices = @transform_2, window_bounds = array<i64: 128, 448>}, {pipeline_mode = #tpu.pipeline_mode<synchronous>, transform_indices = @transform_3, window_bounds = array<i64: 128, 448>}, {pipeline_mode = #tpu.pipeline_mode<synchronous>, transform_indices = @transform_4, window_bounds = array<i64: 4, 32>}, {pipeline_mode = #tpu.pipeline_mode<synchronous>, transform_indices = @transform_5, window_bounds = array<i64: 1, 32>}, {pipeline_mode = #tpu.pipeline_mode<synchronous>, transform_indices = @transform_6, window_bounds = array<i64: 32, 16>}, {pipeline_mode = #tpu.pipeline_mode<synchronous>, transform_indices = @transform_7, window_bounds = array<i64: 1, 16>}, {pipeline_mode = #tpu.pipeline_mode<synchronous>, transform_indices = @transform_8, window_bounds = array<i64: 448, 224>}, {pipeline_mode = #tpu.pipeline_mode<synchronous>, transform_indices = @transform_9, window_bounds = array<i64: 1, 224>}, {pipeline_mode = #tpu.pipeline_mode<synchronous>, transform_indices = @transform_10, window_bounds = array<i64: 224, 28>}, {pipeline_mode = #tpu.pipeline_mode<synchronous>, transform_indices = @transform_11, window_bounds = array<i64: 1, 28>}, {pipeline_mode = #tpu.pipeline_mode<synchronous>, transform_indices = @transform_12, window_bounds = array<i64: 28, 448>}, {pipeline_mode = #tpu.pipeline_mode<synchronous>, transform_indices = @transform_13, window_bounds = array<i64: 448, 16>}, {pipeline_mode = #tpu.pipeline_mode<synchronous>, transform_indices = @transform_14, window_bounds = array<i64: 16, 1>}, {pipeline_mode = #tpu.pipeline_mode<synchronous>, transform_indices = @transform_15, window_bounds = array<i64: 16, 1>}, {pipeline_mode = #tpu.pipeline_mode<synchronous>, transform_indices = @transform_16, window_bounds = array<i64: 1, 1>}, {transform_indices = @transform_17, window_bounds = array<i64: 8, 1>}]} {
    %c0 = arith.constant 0 : index
    %c0_0 = arith.constant 0 : index
    %0 = vector.load %arg1[%c0, %c0_0] : memref<8x128xf32, #tpu.memory_space<vmem>>, vector<8x128xf32>
    %c0_1 = arith.constant 0 : index
    %c0_2 = arith.constant 0 : index
    %1 = vector.load %arg3[%c0_1, %c0_2] : memref<128x448xf32, #tpu.memory_space<vmem>>, vector<128x448xf32>
    %cst = arith.constant dense<0.000000e+00> : vector<8x448xf32>
    %2 = tpu.matmul %0, %1, %cst {dimension_numbers = #tpu.dot_dimension_numbers<[1], [0], [0], [1], [0, 0, 1, 1], [], []>} : vector<8x128xf32>, vector<128x448xf32>, vector<8x448xf32> -> vector<8x448xf32>
    %c0_3 = arith.constant 0 : index
    %c0_4 = arith.constant 0 : index
    %3 = vector.load %arg4[%c0_3, %c0_4] : memref<128x448xf32, #tpu.memory_space<vmem>>, vector<128x448xf32>
    %cst_5 = arith.constant dense<0.000000e+00> : vector<8x448xf32>
    %4 = tpu.matmul %0, %3, %cst_5 {dimension_numbers = #tpu.dot_dimension_numbers<[1], [0], [0], [1], [0, 0, 1, 1], [], []>} : vector<8x128xf32>, vector<128x448xf32>, vector<8x448xf32> -> vector<8x448xf32>
    %5 = arith.mulf %2, %4 : vector<8x448xf32>
    %c0_6 = arith.constant 0 : index
    %c0_7 = arith.constant 0 : index
    %6 = vector.load %arg2[%c0_6, %c0_7] : memref<8x4xf32, #tpu.memory_space<vmem>>, vector<8x4xf32>
    %c0_8 = arith.constant 0 : index
    %c0_9 = arith.constant 0 : index
    %7 = vector.load %arg5[%c0_8, %c0_9] : memref<4x32xf32, #tpu.memory_space<vmem>>, vector<4x32xf32>
    %cst_10 = arith.constant dense<0.000000e+00> : vector<8x32xf32>
    %8 = tpu.matmul %6, %7, %cst_10 {dimension_numbers = #tpu.dot_dimension_numbers<[1], [0], [0], [1], [0, 0, 1, 1], [], []>} : vector<8x4xf32>, vector<4x32xf32>, vector<8x32xf32> -> vector<8x32xf32>
    %c0_11 = arith.constant 0 : index
    %c0_12 = arith.constant 0 : index
    %9 = vector.load %arg6[%c0_11, %c0_12] : memref<1x32xf32, #tpu.memory_space<vmem>>, vector<1x32xf32>
    %10 = vector.broadcast %9 : vector<1x32xf32> to vector<8x32xf32>
    %11 = arith.addf %8, %10 : vector<8x32xf32>
    %cst_13 = arith.constant 0.000000e+00 : f32
    %12 = vector.broadcast %cst_13 : f32 to vector<8x32xf32>
    %13 = arith.maximumf %11, %12 : vector<8x32xf32>
    %c0_14 = arith.constant 0 : index
    %c0_15 = arith.constant 0 : index
    %14 = vector.load %arg7[%c0_14, %c0_15] : memref<32x16xf32, #tpu.memory_space<vmem>>, vector<32x16xf32>
    %cst_16 = arith.constant dense<0.000000e+00> : vector<8x16xf32>
    %15 = tpu.matmul %13, %14, %cst_16 {dimension_numbers = #tpu.dot_dimension_numbers<[1], [0], [0], [1], [0, 0, 1, 1], [], []>} : vector<8x32xf32>, vector<32x16xf32>, vector<8x16xf32> -> vector<8x16xf32>
    %c0_17 = arith.constant 0 : index
    %c0_18 = arith.constant 0 : index
    %16 = vector.load %arg8[%c0_17, %c0_18] : memref<1x16xf32, #tpu.memory_space<vmem>>, vector<1x16xf32>
    %17 = vector.broadcast %16 : vector<1x16xf32> to vector<8x16xf32>
    %18 = arith.addf %15, %17 : vector<8x16xf32>
    %cst_19 = arith.constant 0.000000e+00 : f32
    %19 = vector.broadcast %cst_19 : f32 to vector<8x16xf32>
    %20 = arith.maximumf %18, %19 : vector<8x16xf32>
    %c0_20 = arith.constant 0 : index
    %c0_21 = arith.constant 0 : index
    %21 = vector.load %arg9[%c0_20, %c0_21] : memref<448x224xf32, #tpu.memory_space<vmem>>, vector<448x224xf32>
    %cst_22 = arith.constant dense<0.000000e+00> : vector<8x224xf32>
    %22 = tpu.matmul %5, %21, %cst_22 {dimension_numbers = #tpu.dot_dimension_numbers<[1], [0], [0], [1], [0, 0, 1, 1], [], []>} : vector<8x448xf32>, vector<448x224xf32>, vector<8x224xf32> -> vector<8x224xf32>
    %c0_23 = arith.constant 0 : index
    %c0_24 = arith.constant 0 : index
    %23 = vector.load %arg10[%c0_23, %c0_24] : memref<1x224xf32, #tpu.memory_space<vmem>>, vector<1x224xf32>
    %24 = vector.broadcast %23 : vector<1x224xf32> to vector<8x224xf32>
    %25 = arith.addf %22, %24 : vector<8x224xf32>
    %cst_25 = arith.constant 0.000000e+00 : f32
    %26 = vector.broadcast %cst_25 : f32 to vector<8x224xf32>
    %27 = arith.maximumf %25, %26 : vector<8x224xf32>
    %c0_26 = arith.constant 0 : index
    %c0_27 = arith.constant 0 : index
    %28 = vector.load %arg11[%c0_26, %c0_27] : memref<224x28xf32, #tpu.memory_space<vmem>>, vector<224x28xf32>
    %cst_28 = arith.constant dense<0.000000e+00> : vector<8x28xf32>
    %29 = tpu.matmul %27, %28, %cst_28 {dimension_numbers = #tpu.dot_dimension_numbers<[1], [0], [0], [1], [0, 0, 1, 1], [], []>} : vector<8x224xf32>, vector<224x28xf32>, vector<8x28xf32> -> vector<8x28xf32>
    %c0_29 = arith.constant 0 : index
    %c0_30 = arith.constant 0 : index
    %30 = vector.load %arg12[%c0_29, %c0_30] : memref<1x28xf32, #tpu.memory_space<vmem>>, vector<1x28xf32>
    %31 = vector.broadcast %30 : vector<1x28xf32> to vector<8x28xf32>
    %32 = arith.addf %29, %31 : vector<8x28xf32>
    %cst_31 = arith.constant dense<0xFF800000> : vector<8xf32>
    %33 = vector.multi_reduction <maximumf>, %32, %cst_31 [1] : vector<8x28xf32> to vector<8xf32>
    %34 = vector.shape_cast %33 : vector<8xf32> to vector<8x1xf32>
    %35 = vector.broadcast %34 : vector<8x1xf32> to vector<8x28xf32>
    %36 = arith.subf %32, %35 : vector<8x28xf32>
    %37 = math.exp %36 : vector<8x28xf32>
    %cst_32 = arith.constant dense<0.000000e+00> : vector<8xf32>
    %38 = vector.multi_reduction <add>, %37, %cst_32 [1] : vector<8x28xf32> to vector<8xf32>
    %39 = vector.shape_cast %38 : vector<8xf32> to vector<8x1xf32>
    %40 = tpu.reciprocal %39 {approx = true} : vector<8x1xf32> -> vector<8x1xf32>
    %41 = vector.broadcast %40 : vector<8x1xf32> to vector<8x28xf32>
    %42 = arith.mulf %37, %41 : vector<8x28xf32>
    %c0_33 = arith.constant 0 : index
    %c0_34 = arith.constant 0 : index
    %43 = vector.load %arg13[%c0_33, %c0_34] : memref<28x448xf32, #tpu.memory_space<vmem>>, vector<28x448xf32>
    %cst_35 = arith.constant dense<0.000000e+00> : vector<8x448xf32>
    %44 = tpu.matmul %42, %43, %cst_35 {dimension_numbers = #tpu.dot_dimension_numbers<[1], [0], [0], [1], [0, 0, 1, 1], [], []>} : vector<8x28xf32>, vector<28x448xf32>, vector<8x448xf32> -> vector<8x448xf32>
    %45 = arith.mulf %5, %44 : vector<8x448xf32>
    %c0_36 = arith.constant 0 : index
    %c0_37 = arith.constant 0 : index
    %46 = vector.load %arg14[%c0_36, %c0_37] : memref<448x16xf32, #tpu.memory_space<vmem>>, vector<448x16xf32>
    %cst_38 = arith.constant dense<0.000000e+00> : vector<8x16xf32>
    %47 = tpu.matmul %45, %46, %cst_38 {dimension_numbers = #tpu.dot_dimension_numbers<[1], [0], [0], [1], [0, 0, 1, 1], [], []>} : vector<8x448xf32>, vector<448x16xf32>, vector<8x16xf32> -> vector<8x16xf32>
    %c0_39 = arith.constant 0 : index
    %c0_40 = arith.constant 0 : index
    %48 = vector.load %arg15[%c0_39, %c0_40] : memref<16x1xf32, #tpu.memory_space<vmem>>, vector<16x1xf32>
    %cst_41 = arith.constant dense<0.000000e+00> : vector<8x1xf32>
    %49 = tpu.matmul %20, %48, %cst_41 {dimension_numbers = #tpu.dot_dimension_numbers<[1], [0], [0], [1], [0, 0, 1, 1], [], []>} : vector<8x16xf32>, vector<16x1xf32>, vector<8x1xf32> -> vector<8x1xf32>
    %c0_42 = arith.constant 0 : index
    %c0_43 = arith.constant 0 : index
    %50 = vector.load %arg16[%c0_42, %c0_43] : memref<16x1xf32, #tpu.memory_space<vmem>>, vector<16x1xf32>
    %cst_44 = arith.constant dense<0.000000e+00> : vector<8x1xf32>
    %51 = tpu.matmul %47, %50, %cst_44 {dimension_numbers = #tpu.dot_dimension_numbers<[1], [0], [0], [1], [0, 0, 1, 1], [], []>} : vector<8x16xf32>, vector<16x1xf32>, vector<8x1xf32> -> vector<8x1xf32>
    %52 = arith.addf %49, %51 : vector<8x1xf32>
    %c0_45 = arith.constant 0 : index
    %c0_46 = arith.constant 0 : index
    %53 = vector.load %arg17[%c0_45, %c0_46] : memref<1x1xf32, #tpu.memory_space<vmem>>, vector<1x1xf32>
    %54 = vector.broadcast %53 : vector<1x1xf32> to vector<8x1xf32>
    %55 = arith.addf %52, %54 : vector<8x1xf32>
    %cst_47 = arith.constant 0.000000e+00 : f32
    %56 = vector.broadcast %cst_47 : f32 to vector<8x1xf32>
    %57 = arith.subf %56, %55 : vector<8x1xf32>
    %58 = math.exp %57 : vector<8x1xf32>
    %cst_48 = arith.constant 1.000000e+00 : f32
    %59 = vector.broadcast %cst_48 : f32 to vector<8x1xf32>
    %60 = arith.addf %59, %58 : vector<8x1xf32>
    %61 = tpu.reciprocal %60 {approx = true} : vector<8x1xf32> -> vector<8x1xf32>
    %c0_49 = arith.constant 0 : index
    %c0_50 = arith.constant 0 : index
    %62 = vector.load %arg18[%c0_49, %c0_50] : memref<8x1xf32, #tpu.memory_space<vmem>>, vector<8x1xf32>
    tpu.vector_store %arg18[%c0_49, %c0_50], %61 {strides = array<i32>} : memref<8x1xf32, #tpu.memory_space<vmem>>, vector<8x1xf32>,
    return
  }
  func.func @transform_0(%arg0: i32) -> (i32, i32) {
    %c0_i32 = arith.constant 0 : i32
    %c0_i32_0 = arith.constant 0 : i32
    return %arg0, %c0_i32 : i32, i32
  }
  func.func @transform_1(%arg0: i32) -> (i32, i32) {
    %c0_i32 = arith.constant 0 : i32
    %c0_i32_0 = arith.constant 0 : i32
    return %arg0, %c0_i32 : i32, i32
  }
  func.func @transform_2(%arg0: i32) -> (i32, i32) {
    %c0_i32 = arith.constant 0 : i32
    %c0_i32_0 = arith.constant 0 : i32
    %c0_i32_1 = arith.constant 0 : i32
    return %c0_i32, %c0_i32_0 : i32, i32
  }
  func.func @transform_3(%arg0: i32) -> (i32, i32) {
    %c0_i32 = arith.constant 0 : i32
    %c0_i32_0 = arith.constant 0 : i32
    %c0_i32_1 = arith.constant 0 : i32
    return %c0_i32, %c0_i32_0 : i32, i32
  }
  func.func @transform_4(%arg0: i32) -> (i32, i32) {
    %c0_i32 = arith.constant 0 : i32
    %c0_i32_0 = arith.constant 0 : i32
    %c0_i32_1 = arith.constant 0 : i32
    return %c0_i32, %c0_i32_0 : i32, i32
  }
  func.func @transform_5(%arg0: i32) -> (i32, i32) {
    %c0_i32 = arith.constant 0 : i32
    %c0_i32_0 = arith.constant 0 : i32
    %c0_i32_1 = arith.constant 0 : i32
    return %c0_i32, %c0_i32_0 : i32, i32
  }
  func.func @transform_6(%arg0: i32) -> (i32, i32) {
    %c0_i32 = arith.constant 0 : i32
    %c0_i32_0 = arith.constant 0 : i32
    %c0_i32_1 = arith.constant 0 : i32
    return %c0_i32, %c0_i32_0 : i32, i32
  }
  func.func @transform_7(%arg0: i32) -> (i32, i32) {
    %c0_i32 = arith.constant 0 : i32
    %c0_i32_0 = arith.constant 0 : i32
    %c0_i32_1 = arith.constant 0 : i32
    return %c0_i32, %c0_i32_0 : i32, i32
  }
  func.func @transform_8(%arg0: i32) -> (i32, i32) {
    %c0_i32 = arith.constant 0 : i32
    %c0_i32_0 = arith.constant 0 : i32
    %c0_i32_1 = arith.constant 0 : i32
    return %c0_i32, %c0_i32_0 : i32, i32
  }
  func.func @transform_9(%arg0: i32) -> (i32, i32) {
    %c0_i32 = arith.constant 0 : i32
    %c0_i32_0 = arith.constant 0 : i32
    %c0_i32_1 = arith.constant 0 : i32
    return %c0_i32, %c0_i32_0 : i32, i32
  }
  func.func @transform_10(%arg0: i32) -> (i32, i32) {
    %c0_i32 = arith.constant 0 : i32
    %c0_i32_0 = arith.constant 0 : i32
    %c0_i32_1 = arith.constant 0 : i32
    return %c0_i32, %c0_i32_0 : i32, i32
  }
  func.func @transform_11(%arg0: i32) -> (i32, i32) {
    %c0_i32 = arith.constant 0 : i32
    %c0_i32_0 = arith.constant 0 : i32
    %c0_i32_1 = arith.constant 0 : i32
    return %c0_i32, %c0_i32_0 : i32, i32
  }
  func.func @transform_12(%arg0: i32) -> (i32, i32) {
    %c0_i32 = arith.constant 0 : i32
    %c0_i32_0 = arith.constant 0 : i32
    %c0_i32_1 = arith.constant 0 : i32
    return %c0_i32, %c0_i32_0 : i32, i32
  }
  func.func @transform_13(%arg0: i32) -> (i32, i32) {
    %c0_i32 = arith.constant 0 : i32
    %c0_i32_0 = arith.constant 0 : i32
    %c0_i32_1 = arith.constant 0 : i32
    return %c0_i32, %c0_i32_0 : i32, i32
  }
  func.func @transform_14(%arg0: i32) -> (i32, i32) {
    %c0_i32 = arith.constant 0 : i32
    %c0_i32_0 = arith.constant 0 : i32
    %c0_i32_1 = arith.constant 0 : i32
    return %c0_i32, %c0_i32_0 : i32, i32
  }
  func.func @transform_15(%arg0: i32) -> (i32, i32) {
    %c0_i32 = arith.constant 0 : i32
    %c0_i32_0 = arith.constant 0 : i32
    %c0_i32_1 = arith.constant 0 : i32
    return %c0_i32, %c0_i32_0 : i32, i32
  }
  func.func @transform_16(%arg0: i32) -> (i32, i32) {
    %c0_i32 = arith.constant 0 : i32
    %c0_i32_0 = arith.constant 0 : i32
    %c0_i32_1 = arith.constant 0 : i32
    return %c0_i32, %c0_i32_0 : i32, i32
  }
  func.func @transform_17(%arg0: i32) -> (i32, i32) {
    %c0_i32 = arith.constant 0 : i32
    %c0_i32_0 = arith.constant 0 : i32
    return %arg0, %c0_i32 : i32, i32
  }
}

</mosaic_0001>

<llo_original>
// kernel: tpu_custom_call.1
$region0: #{tpu_custom_call.1}
  #allocation0 [shape = 'u32[]', space=smem, size = 0x4, offset = 0x4, fixed_abs, tag = 'smem constant byte address 0x4 - core index']
  #allocation1 [shape = 'u32[144,128]{1,0:T(1,128)}', space=vmem, size = 0x12000, scoped, tag = 'internal scratch']
  #allocation2 [shape = 'f32[1,1]{1,0:T(1,128)S(1)}', space=vmem, size = 0x200, scoped, tag = 'scoped memory for tpu_custom_call.1']
  %s0 = inlined_call_operand.vmem [shape: f32[8,128], index: 0, kind: input, shape index: {}]
  %s1 = inlined_call_operand.vmem [shape: f32[8,4], index: 1, kind: input, shape index: {}]
  %s2 = inlined_call_operand.vmem [shape: f32[128,448], index: 2, kind: input, shape index: {}]
  %s3 = inlined_call_operand.vmem [shape: f32[128,448], index: 3, kind: input, shape index: {}]
  %s4 = inlined_call_operand.vmem [shape: f32[4,32], index: 4, kind: input, shape index: {}]
  %s5 = inlined_call_operand.vmem [shape: f32[1,32], index: 5, kind: input, shape index: {}]
  %s6 = inlined_call_operand.vmem [shape: f32[32,16], index: 6, kind: input, shape index: {}]
  %s7 = inlined_call_operand.vmem [shape: f32[1,16], index: 7, kind: input, shape index: {}]
  %s8 = inlined_call_operand.vmem [shape: f32[448,224], index: 8, kind: input, shape index: {}]
  %s9 = inlined_call_operand.vmem [shape: f32[1,224], index: 9, kind: input, shape index: {}]
  %s10 = inlined_call_operand.vmem [shape: f32[224,28], index: 10, kind: input, shape index: {}]
  %s11 = inlined_call_operand.vmem [shape: f32[1,28], index: 11, kind: input, shape index: {}]
  %s12 = inlined_call_operand.vmem [shape: f32[28,448], index: 12, kind: input, shape index: {}]
  %s13 = inlined_call_operand.vmem [shape: f32[448,16], index: 13, kind: input, shape index: {}]
  %s14 = inlined_call_operand.vmem [shape: f32[16,1], index: 14, kind: input, shape index: {}]
  %s15 = inlined_call_operand.vmem [shape: f32[16,1], index: 15, kind: input, shape index: {}]
  %s16 = inlined_call_operand.<no memory space> [shape: f32[1,1], index: 16, kind: input, shape index: {}]
  %s17 = inlined_call_operand.vmem [shape: f32[8,1], index: 17, kind: output, shape index: {}]
  %s18 = sld [smem:[#allocation0]]
  $region78: #{tpu_custom_call.1} parent=0
    _
  %s20 = ssub.s32 1, %s18
  %s21 = scalar_select 0, %s20, %s18
  %v22 = vstv %s16
  %23 = vst [vmem:[#allocation2] sm:$0x1] %v22
  // Predicated region
  $region2: #{tpu_custom_call.1} parent=0 // pred_check
    _
  $region3: #{tpu_custom_call.1} parent=0 // pred_check_branch
    %25 = sbr.rel (0) target = $region5
  $region4: #{tpu_custom_call.1} parent=0 // pred_region
    _
  $region5: #{tpu_custom_call.1} parent=0 // pred_fallthru
    _
  // Predicated region
  $region6: #{tpu_custom_call.1} parent=0 // pred_check
    _
  $region7: #{tpu_custom_call.1} parent=0 // pred_check_branch
    %27 = sbr.rel (0) target = $region9
  $region8: #{tpu_custom_call.1} parent=0 // pred_region
    _
  $region9: #{tpu_custom_call.1} parent=0 // pred_fallthru
    _
  // Predicated region
  $region10: #{tpu_custom_call.1} parent=0 // pred_check
    _
  $region11: #{tpu_custom_call.1} parent=0 // pred_check_branch
    %29 = sbr.rel (0) target = $region13
  $region12: #{tpu_custom_call.1} parent=0 // pred_region
    _
  $region13: #{tpu_custom_call.1} parent=0 // pred_fallthru
    _
  // Predicated region
  $region14: #{tpu_custom_call.1} parent=0 // pred_check
    _
  $region15: #{tpu_custom_call.1} parent=0 // pred_check_branch
    %31 = sbr.rel (0) target = $region17
  $region16: #{tpu_custom_call.1} parent=0 // pred_region
    _
  $region17: #{tpu_custom_call.1} parent=0 // pred_fallthru
    _
  // Predicated region
  $region18: #{tpu_custom_call.1} parent=0 // pred_check
    _
  $region19: #{tpu_custom_call.1} parent=0 // pred_check_branch
    %33 = sbr.rel (0) target = $region21
  $region20: #{tpu_custom_call.1} parent=0 // pred_region
    _
  $region21: #{tpu_custom_call.1} parent=0 // pred_fallthru
    _
  // Predicated region
  $region22: #{tpu_custom_call.1} parent=0 // pred_check
    _
  $region23: #{tpu_custom_call.1} parent=0 // pred_check_branch
    %35 = sbr.rel (0) target = $region25
  $region24: #{tpu_custom_call.1} parent=0 // pred_region
    _
  $region25: #{tpu_custom_call.1} parent=0 // pred_fallthru
    _
  // Predicated region
  $region26: #{tpu_custom_call.1} parent=0 // pred_check
    _
  $region27: #{tpu_custom_call.1} parent=0 // pred_check_branch
    %37 = sbr.rel (0) target = $region29
  $region28: #{tpu_custom_call.1} parent=0 // pred_region
    _
  $region29: #{tpu_custom_call.1} parent=0 // pred_fallthru
    _
  // Predicated region
  $region30: #{tpu_custom_call.1} parent=0 // pred_check
    _
  $region31: #{tpu_custom_call.1} parent=0 // pred_check_branch
    %39 = sbr.rel (0) target = $region33
  $region32: #{tpu_custom_call.1} parent=0 // pred_region
    _
  $region33: #{tpu_custom_call.1} parent=0 // pred_fallthru
    _
  // Predicated region
  $region34: #{tpu_custom_call.1} parent=0 // pred_check
    _
  $region35: #{tpu_custom_call.1} parent=0 // pred_check_branch
    %41 = sbr.rel (0) target = $region37
  $region36: #{tpu_custom_call.1} parent=0 // pred_region
    _
  $region37: #{tpu_custom_call.1} parent=0 // pred_fallthru
    _
  // Predicated region
  $region38: #{tpu_custom_call.1} parent=0 // pred_check
    _
  $region39: #{tpu_custom_call.1} parent=0 // pred_check_branch
    %43 = sbr.rel (0) target = $region41
  $region40: #{tpu_custom_call.1} parent=0 // pred_region
    _
  $region41: #{tpu_custom_call.1} parent=0 // pred_fallthru
    _
  // Predicated region
  $region42: #{tpu_custom_call.1} parent=0 // pred_check
    _
  $region43: #{tpu_custom_call.1} parent=0 // pred_check_branch
    %45 = sbr.rel (0) target = $region45
  $region44: #{tpu_custom_call.1} parent=0 // pred_region
    _
  $region45: #{tpu_custom_call.1} parent=0 // pred_fallthru
    _
  // Predicated region
  $region46: #{tpu_custom_call.1} parent=0 // pred_check
    _
  $region47: #{tpu_custom_call.1} parent=0 // pred_check_branch
    %47 = sbr.rel (0) target = $region49
  $region48: #{tpu_custom_call.1} parent=0 // pred_region
    _
  $region49: #{tpu_custom_call.1} parent=0 // pred_fallthru
    _
  // Predicated region
  $region50: #{tpu_custom_call.1} parent=0 // pred_check
    _
  $region51: #{tpu_custom_call.1} parent=0 // pred_check_branch
    %49 = sbr.rel (0) target = $region53
  $region52: #{tpu_custom_call.1} parent=0 // pred_region
    _
  $region53: #{tpu_custom_call.1} parent=0 // pred_fallthru
    _
  // Predicated region
  $region54: #{tpu_custom_call.1} parent=0 // pred_check
    _
  $region55: #{tpu_custom_call.1} parent=0 // pred_check_branch
    %51 = sbr.rel (0) target = $region57
  $region56: #{tpu_custom_call.1} parent=0 // pred_region
    _
  $region57: #{tpu_custom_call.1} parent=0 // pred_fallthru
    _
  // Predicated region
  $region58: #{tpu_custom_call.1} parent=0 // pred_check
    _
  $region59: #{tpu_custom_call.1} parent=0 // pred_check_branch
    %53 = sbr.rel (0) target = $region61
  $region60: #{tpu_custom_call.1} parent=0 // pred_region
    _
  $region61: #{tpu_custom_call.1} parent=0 // pred_fallthru
    _
  // Predicated region
  $region62: #{tpu_custom_call.1} parent=0 // pred_check
    _
  $region63: #{tpu_custom_call.1} parent=0 // pred_check_branch
    %55 = sbr.rel (0) target = $region65
  $region64: #{tpu_custom_call.1} parent=0 // pred_region
    _
  $region65: #{tpu_custom_call.1} parent=0 // pred_fallthru
    _
  // Predicated region
  $region66: #{tpu_custom_call.1} parent=0 // pred_check
    _
  $region67: #{tpu_custom_call.1} parent=0 // pred_check_branch
    %57 = sbr.rel (0) target = $region69
  $region68: #{tpu_custom_call.1} parent=0 // pred_region
    _
  $region69: #{tpu_custom_call.1} parent=0 // pred_fallthru
    _
  %v58 = vld [vmem:[%s0] sm:$0xff]
  %v59 = vld [vmem:[%s2] sm:$0xff]
  %v60 = vld [vmem:[%s2 + $0x8] sm:$0xff]
  %v61 = vld [vmem:[%s2 + $0x10] sm:$0xff]
  %v62 = vld [vmem:[%s2 + $0x18] sm:$0xff]
  %v63 = vld [vmem:[%s2 + $0x20] sm:$0xff]
  %v64 = vld [vmem:[%s2 + $0x28] sm:$0xff]
  %v65 = vld [vmem:[%s2 + $0x30] sm:$0xff]
  %v66 = vld [vmem:[%s2 + $0x38] sm:$0xff]
  %v67 = vld [vmem:[%s2 + $0x40] sm:$0xff]
  %v68 = vld [vmem:[%s2 + $0x48] sm:$0xff]
  %v69 = vld [vmem:[%s2 + $0x50] sm:$0xff]
  %v70 = vld [vmem:[%s2 + $0x58] sm:$0xff]
  %v71 = vld [vmem:[%s2 + $0x60] sm:$0xff]
  %v72 = vld [vmem:[%s2 + $0x68] sm:$0xff]
  %v73 = vld [vmem:[%s2 + $0x70] sm:$0xff]
  %v74 = vld [vmem:[%s2 + $0x78] sm:$0xff]
  %v75 = vld [vmem:[%s2 + $0x80] sm:$0xff]
  %v76 = vld [vmem:[%s2 + $0x88] sm:$0xff]
  %v77 = vld [vmem:[%s2 + $0x90] sm:$0xff]
  %v78 = vld [vmem:[%s2 + $0x98] sm:$0xff]
  %v79 = vld [vmem:[%s2 + $0xa0] sm:$0xff]
  %v80 = vld [vmem:[%s2 + $0xa8] sm:$0xff]
  %v81 = vld [vmem:[%s2 + $0xb0] sm:$0xff]
  %v82 = vld [vmem:[%s2 + $0xb8] sm:$0xff]
  %v83 = vld [vmem:[%s2 + $0xc0] sm:$0xff]
  %v84 = vld [vmem:[%s2 + $0xc8] sm:$0xff]
  %v85 = vld [vmem:[%s2 + $0xd0] sm:$0xff]
  %v86 = vld [vmem:[%s2 + $0xd8] sm:$0xff]
  %v87 = vld [vmem:[%s2 + $0xe0] sm:$0xff]
  %v88 = vld [vmem:[%s2 + $0xe8] sm:$0xff]
  %v89 = vld [vmem:[%s2 + $0xf0] sm:$0xff]
  %v90 = vld [vmem:[%s2 + $0xf8] sm:$0xff]
  %v91 = vld [vmem:[%s2 + $0x100] sm:$0xff]
  %v92 = vld [vmem:[%s2 + $0x108] sm:$0xff]
  %v93 = vld [vmem:[%s2 + $0x110] sm:$0xff]
  %v94 = vld [vmem:[%s2 + $0x118] sm:$0xff]
  %v95 = vld [vmem:[%s2 + $0x120] sm:$0xff]
  %v96 = vld [vmem:[%s2 + $0x128] sm:$0xff]
  %v97 = vld [vmem:[%s2 + $0x130] sm:$0xff]
  %v98 = vld [vmem:[%s2 + $0x138] sm:$0xff]
  %v99 = vld [vmem:[%s2 + $0x140] sm:$0xff]
  %v100 = vld [vmem:[%s2 + $0x148] sm:$0xff]
  %v101 = vld [vmem:[%s2 + $0x150] sm:$0xff]
  %v102 = vld [vmem:[%s2 + $0x158] sm:$0xff]
  %v103 = vld [vmem:[%s2 + $0x160] sm:$0xff]
  %v104 = vld [vmem:[%s2 + $0x168] sm:$0xff]
  %v105 = vld [vmem:[%s2 + $0x170] sm:$0xff]
  %v106 = vld [vmem:[%s2 + $0x178] sm:$0xff]
  %v107 = vld [vmem:[%s2 + $0x180] sm:$0xff]
  %v108 = vld [vmem:[%s2 + $0x188] sm:$0xff]
  %v109 = vld [vmem:[%s2 + $0x190] sm:$0xff]
  %v110 = vld [vmem:[%s2 + $0x198] sm:$0xff]
  %v111 = vld [vmem:[%s2 + $0x1a0] sm:$0xff]
  %v112 = vld [vmem:[%s2 + $0x1a8] sm:$0xff]
  %v113 = vld [vmem:[%s2 + $0x1b0] sm:$0xff]
  %v114 = vld [vmem:[%s2 + $0x1b8] sm:$0xff]
  %v115 = vld [vmem:[%s2 + $0x1c0] sm:$0xff]
  %v116 = vld [vmem:[%s2 + $0x1c8] sm:$0xff]
  %v117 = vld [vmem:[%s2 + $0x1d0] sm:$0xff]
  %v118 = vld [vmem:[%s2 + $0x1d8] sm:$0xff]
  %v119 = vld [vmem:[%s2 + $0x1e0] sm:$0xff]
  %v120 = vld [vmem:[%s2 + $0x1e8] sm:$0xff]
  %v121 = vld [vmem:[%s2 + $0x1f0] sm:$0xff]
  %v122 = vld [vmem:[%s2 + $0x1f8] sm:$0xff]
  %123 = vmatprep.subr.mxu0 %v120
  %124 = vmatpush1.msra.mxu0 %v119
  %125 = vmatprep.subr.mxu0 %v116
  %126 = vmatpush1.msra.mxu0 %v115
  %127 = vmatprep.subr.mxu0 %v112
  %128 = vmatpush1.msra.mxu0 %v111
  %129 = vmatprep.subr.mxu0 %v108
  %130 = vmatpush1.msra.mxu0 %v107
  %131 = vmatprep.subr.mxu0 %v104
  %132 = vmatpush1.msra.mxu0 %v103
  %133 = vmatprep.subr.mxu0 %v100
  %134 = vmatpush1.msra.mxu0 %v99
  %135 = vmatprep.subr.mxu0 %v96
  %136 = vmatpush1.msra.mxu0 %v95
  %137 = vmatprep.subr.mxu0 %v92
  %138 = vmatpush1.msra.mxu0 %v91
  %139 = vmatprep.subr.mxu0 %v88
  %140 = vmatpush1.msra.mxu0 %v87
  %141 = vmatprep.subr.mxu0 %v84
  %142 = vmatpush1.msra.mxu0 %v83
  %143 = vmatprep.subr.mxu0 %v80
  %144 = vmatpush1.msra.mxu0 %v79
  %145 = vmatprep.subr.mxu0 %v76
  %146 = vmatpush1.msra.mxu0 %v75
  %147 = vmatprep.subr.mxu0 %v72
  %148 = vmatpush1.msra.mxu0 %v71
  %149 = vmatprep.subr.mxu0 %v68
  %150 = vmatpush1.msra.mxu0 %v67
  %151 = vmatprep.subr.mxu0 %v64
  %152 = vmatpush1.msra.mxu0 %v63
  %153 = vmatprep.subr.mxu0 %v60
  %154 = vmatpush1.msra.mxu0 %v59
  %155 = vmatprep.subr.mxu0 0.0
  %156 = vmatpush2.msra.mxu0 0.0
  %157 = vmatprep.subr.mxu0 0.0
  %158 = vmatpush2.msra.mxu0 0.0
  %159 = vmatprep.subr.mxu0 0.0
  %160 = vmatpush2.msra.mxu0 0.0
  %161 = vmatprep.subr.mxu0 0.0
  %162 = vmatpush2.msra.mxu0 0.0
  %163 = vmatprep.subr.mxu0 0.0
  %164 = vmatpush2.msra.mxu0 0.0
  %165 = vmatprep.subr.mxu0 0.0
  %166 = vmatpush2.msra.mxu0 0.0
  %167 = vmatprep.subr.mxu0 0.0
  %168 = vmatpush2.msra.mxu0 0.0
  %169 = vmatprep.subr.mxu0 0.0
  %170 = vmatpush2.msra.mxu0 0.0
  %171 = vmatprep.subr.mxu0 0.0
  %172 = vmatpush2.msra.mxu0 0.0
  %173 = vmatprep.subr.mxu0 0.0
  %174 = vmatpush2.msra.mxu0 0.0
  %175 = vmatprep.subr.mxu0 0.0
  %176 = vmatpush2.msra.mxu0 0.0
  %177 = vmatprep.subr.mxu0 0.0
  %178 = vmatpush2.msra.mxu0 0.0
  %179 = vmatprep.subr.mxu0 0.0
  %180 = vmatpush2.msra.mxu0 0.0
  %181 = vmatprep.subr.mxu0 0.0
  %182 = vmatpush2.msra.mxu0 0.0
  %183 = vmatprep.subr.mxu0 0.0
  %184 = vmatpush2.msra.mxu0 0.0
  %185 = vmatprep.subr.mxu0 0.0
  %186 = vmatpush2.msra.mxu0 0.0
  %187 = vmatprep.mubr.f32.mxu0 0.0
  %188 = vmatmul.mubr.f32.gmra.mxu0 %v58
  %v189 = vpop.f32.mrf.mxu0
  %v190 = vadd.f32 0.0, %v189
  %v191 = vpop.f32.mrf.mxu0
  %v192 = vadd.f32 0.0, %v191
  %193 = vdwg.mxu0
  %194 = vmatprep.subr.mxu0 %v122
  %195 = vmatpush1.msra.mxu0 %v121
  %196 = vmatprep.subr.mxu0 %v118
  %197 = vmatpush1.msra.mxu0 %v117
  %198 = vmatprep.subr.mxu0 %v114
  %199 = vmatpush1.msra.mxu0 %v113
  %200 = vmatprep.subr.mxu0 %v110
  %201 = vmatpush1.msra.mxu0 %v109
  %202 = vmatprep.subr.mxu0 %v106
  %203 = vmatpush1.msra.mxu0 %v105
  %204 = vmatprep.subr.mxu0 %v102
  %205 = vmatpush1.msra.mxu0 %v101
  %206 = vmatprep.subr.mxu0 %v98
  %207 = vmatpush1.msra.mxu0 %v97
  %208 = vmatprep.subr.mxu0 %v94
  %209 = vmatpush1.msra.mxu0 %v93
  %210 = vmatprep.subr.mxu0 %v90
  %211 = vmatpush1.msra.mxu0 %v89
  %212 = vmatprep.subr.mxu0 %v86
  %213 = vmatpush1.msra.mxu0 %v85
  %214 = vmatprep.subr.mxu0 %v82
  %215 = vmatpush1.msra.mxu0 %v81
  %216 = vmatprep.subr.mxu0 %v78
  %217 = vmatpush1.msra.mxu0 %v77
  %218 = vmatprep.subr.mxu0 %v74
  %219 = vmatpush1.msra.mxu0 %v73
  %220 = vmatprep.subr.mxu0 %v70
  %221 = vmatpush1.msra.mxu0 %v69
  %222 = vmatprep.subr.mxu0 %v66
  %223 = vmatpush1.msra.mxu0 %v65
  %224 = vmatprep.subr.mxu0 %v62
  %225 = vmatpush1.msra.mxu0 %v61
  %226 = vmatprep.subr.mxu0 0.0
  %227 = vmatpush2.msra.mxu0 0.0
  %228 = vmatprep.subr.mxu0 0.0
  %229 = vmatpush2.msra.mxu0 0.0
  %230 = vmatprep.subr.mxu0 0.0
  %231 = vmatpush2.msra.mxu0 0.0
  %232 = vmatprep.subr.mxu0 0.0
  %233 = vmatpush2.msra.mxu0 0.0
  %234 = vmatprep.subr.mxu0 0.0
  %235 = vmatpush2.msra.mxu0 0.0
  %236 = vmatprep.subr.mxu0 0.0
  %237 = vmatpush2.msra.mxu0 0.0
  %238 = vmatprep.subr.mxu0 0.0
  %239 = vmatpush2.msra.mxu0 0.0
  %240 = vmatprep.subr.mxu0 0.0
  %241 = vmatpush2.msra.mxu0 0.0
  %242 = vmatprep.subr.mxu0 0.0
  %243 = vmatpush2.msra.mxu0 0.0
  %244 = vmatprep.subr.mxu0 0.0
  %245 = vmatpush2.msra.mxu0 0.0
  %246 = vmatprep.subr.mxu0 0.0
  %247 = vmatpush2.msra.mxu0 0.0
  %248 = vmatprep.subr.mxu0 0.0
  %249 = vmatpush2.msra.mxu0 0.0
  %250 = vmatprep.subr.mxu0 0.0
  %251 = vmatpush2.msra.mxu0 0.0
  %252 = vmatprep.subr.mxu0 0.0
  %253 = vmatpush2.msra.mxu0 0.0
  %254 = vmatprep.subr.mxu0 0.0
  %255 = vmatpush2.msra.mxu0 0.0
  %256 = vmatprep.subr.mxu0 0.0
  %257 = vmatpush2.msra.mxu0 0.0
  %258 = vmatprep.mubr.f32.mxu0 0.0
  %259 = vmatmul.mubr.f32.gmra.mxu0 %v58
  %v260 = vpop.f32.mrf.mxu0
  %v261 = vadd.f32 0.0, %v260
  %v262 = vpop.f32.mrf.mxu0
  %v263 = vadd.f32 0.0, %v262
  %264 = vdwg.mxu0
  %v265 = vld [vmem:[%s3] sm:$0xff]
  %v266 = vld [vmem:[%s3 + $0x8] sm:$0xff]
  %v267 = vld [vmem:[%s3 + $0x10] sm:$0xff]
  %v268 = vld [vmem:[%s3 + $0x18] sm:$0xff]
  %v269 = vld [vmem:[%s3 + $0x20] sm:$0xff]
  %v270 = vld [vmem:[%s3 + $0x28] sm:$0xff]
  %v271 = vld [vmem:[%s3 + $0x30] sm:$0xff]
  %v272 = vld [vmem:[%s3 + $0x38] sm:$0xff]
  %v273 = vld [vmem:[%s3 + $0x40] sm:$0xff]
  %v274 = vld [vmem:[%s3 + $0x48] sm:$0xff]
  %v275 = vld [vmem:[%s3 + $0x50] sm:$0xff]
  %v276 = vld [vmem:[%s3 + $0x58] sm:$0xff]
  %v277 = vld [vmem:[%s3 + $0x60] sm:$0xff]
  %v278 = vld [vmem:[%s3 + $0x68] sm:$0xff]
  %v279 = vld [vmem:[%s3 + $0x70] sm:$0xff]
  %v280 = vld [vmem:[%s3 + $0x78] sm:$0xff]
  %v281 = vld [vmem:[%s3 + $0x80] sm:$0xff]
  %v282 = vld [vmem:[%s3 + $0x88] sm:$0xff]
  %v283 = vld [vmem:[%s3 + $0x90] sm:$0xff]
  %v284 = vld [vmem:[%s3 + $0x98] sm:$0xff]
  %v285 = vld [vmem:[%s3 + $0xa0] sm:$0xff]
  %v286 = vld [vmem:[%s3 + $0xa8] sm:$0xff]
  %v287 = vld [vmem:[%s3 + $0xb0] sm:$0xff]
  %v288 = vld [vmem:[%s3 + $0xb8] sm:$0xff]
  %v289 = vld [vmem:[%s3 + $0xc0] sm:$0xff]
  %v290 = vld [vmem:[%s3 + $0xc8] sm:$0xff]
  %v291 = vld [vmem:[%s3 + $0xd0] sm:$0xff]
  %v292 = vld [vmem:[%s3 + $0xd8] sm:$0xff]
  %v293 = vld [vmem:[%s3 + $0xe0] sm:$0xff]
  %v294 = vld [vmem:[%s3 + $0xe8] sm:$0xff]
  %v295 = vld [vmem:[%s3 + $0xf0] sm:$0xff]
  %v296 = vld [vmem:[%s3 + $0xf8] sm:$0xff]
  %v297 = vld [vmem:[%s3 + $0x100] sm:$0xff]
  %v298 = vld [vmem:[%s3 + $0x108] sm:$0xff]
  %v299 = vld [vmem:[%s3 + $0x110] sm:$0xff]
  %v300 = vld [vmem:[%s3 + $0x118] sm:$0xff]
  %v301 = vld [vmem:[%s3 + $0x120] sm:$0xff]
  %v302 = vld [vmem:[%s3 + $0x128] sm:$0xff]
  %v303 = vld [vmem:[%s3 + $0x130] sm:$0xff]
  %v304 = vld [vmem:[%s3 + $0x138] sm:$0xff]
  %v305 = vld [vmem:[%s3 + $0x140] sm:$0xff]
  %v306 = vld [vmem:[%s3 + $0x148] sm:$0xff]
  %v307 = vld [vmem:[%s3 + $0x150] sm:$0xff]
  %v308 = vld [vmem:[%s3 + $0x158] sm:$0xff]
  %v309 = vld [vmem:[%s3 + $0x160] sm:$0xff]
  %v310 = vld [vmem:[%s3 + $0x168] sm:$0xff]
  %v311 = vld [vmem:[%s3 + $0x170] sm:$0xff]
  %v312 = vld [vmem:[%s3 + $0x178] sm:$0xff]
  %v313 = vld [vmem:[%s3 + $0x180] sm:$0xff]
  %v314 = vld [vmem:[%s3 + $0x188] sm:$0xff]
  %v315 = vld [vmem:[%s3 + $0x190] sm:$0xff]
  %v316 = vld [vmem:[%s3 + $0x198] sm:$0xff]
  %v317 = vld [vmem:[%s3 + $0x1a0] sm:$0xff]
  %v318 = vld [vmem:[%s3 + $0x1a8] sm:$0xff]
  %v319 = vld [vmem:[%s3 + $0x1b0] sm:$0xff]
  %v320 = vld [vmem:[%s3 + $0x1b8] sm:$0xff]
  %v321 = vld [vmem:[%s3 + $0x1c0] sm:$0xff]
  %v322 = vld [vmem:[%s3 + $0x1c8] sm:$0xff]
  %v323 = vld [vmem:[%s3 + $0x1d0] sm:$0xff]
  %v324 = vld [vmem:[%s3 + $0x1d8] sm:$0xff]
  %v325 = vld [vmem:[%s3 + $0x1e0] sm:$0xff]
  %v326 = vld [vmem:[%s3 + $0x1e8] sm:$0xff]
  %v327 = vld [vmem:[%s3 + $0x1f0] sm:$0xff]
  %v328 = vld [vmem:[%s3 + $0x1f8] sm:$0xff]
  %329 = vmatprep.subr.mxu0 %v326
  %330 = vmatpush1.msra.mxu0 %v325
  %331 = vmatprep.subr.mxu0 %v322
  %332 = vmatpush1.msra.mxu0 %v321
  %333 = vmatprep.subr.mxu0 %v318
  %334 = vmatpush1.msra.mxu0 %v317
  %335 = vmatprep.subr.mxu0 %v314
  %336 = vmatpush1.msra.mxu0 %v313
  %337 = vmatprep.subr.mxu0 %v310
  %338 = vmatpush1.msra.mxu0 %v309
  %339 = vmatprep.subr.mxu0 %v306
  %340 = vmatpush1.msra.mxu0 %v305
  %341 = vmatprep.subr.mxu0 %v302
  %342 = vmatpush1.msra.mxu0 %v301
  %343 = vmatprep.subr.mxu0 %v298
  %344 = vmatpush1.msra.mxu0 %v297
  %345 = vmatprep.subr.mxu0 %v294
  %346 = vmatpush1.msra.mxu0 %v293
  %347 = vmatprep.subr.mxu0 %v290
  %348 = vmatpush1.msra.mxu0 %v289
  %349 = vmatprep.subr.mxu0 %v286
  %350 = vmatpush1.msra.mxu0 %v285
  %351 = vmatprep.subr.mxu0 %v282
  %352 = vmatpush1.msra.mxu0 %v281
  %353 = vmatprep.subr.mxu0 %v278
  %354 = vmatpush1.msra.mxu0 %v277
  %355 = vmatprep.subr.mxu0 %v274
  %356 = vmatpush1.msra.mxu0 %v273
  %357 = vmatprep.subr.mxu0 %v270
  %358 = vmatpush1.msra.mxu0 %v269
  %359 = vmatprep.subr.mxu0 %v266
  %360 = vmatpush1.msra.mxu0 %v265
  %361 = vmatprep.subr.mxu0 0.0
  %362 = vmatpush2.msra.mxu0 0.0
  %363 = vmatprep.subr.mxu0 0.0
  %364 = vmatpush2.msra.mxu0 0.0
  %365 = vmatprep.subr.mxu0 0.0
  %366 = vmatpush2.msra.mxu0 0.0
  %367 = vmatprep.subr.mxu0 0.0
  %368 = vmatpush2.msra.mxu0 0.0
  %369 = vmatprep.subr.mxu0 0.0
  %370 = vmatpush2.msra.mxu0 0.0
  %371 = vmatprep.subr.mxu0 0.0
  %372 = vmatpush2.msra.mxu0 0.0
  %373 = vmatprep.subr.mxu0 0.0
  %374 = vmatpush2.msra.mxu0 0.0
  %375 = vmatprep.subr.mxu0 0.0
  %376 = vmatpush2.msra.mxu0 0.0
  %377 = vmatprep.subr.mxu0 0.0
  %378 = vmatpush2.msra.mxu0 0.0
  %379 = vmatprep.subr.mxu0 0.0
  %380 = vmatpush2.msra.mxu0 0.0
  %381 = vmatprep.subr.mxu0 0.0
  %382 = vmatpush2.msra.mxu0 0.0
  %383 = vmatprep.subr.mxu0 0.0
  %384 = vmatpush2.msra.mxu0 0.0
  %385 = vmatprep.subr.mxu0 0.0
  %386 = vmatpush2.msra.mxu0 0.0
  %387 = vmatprep.subr.mxu0 0.0
  %388 = vmatpush2.msra.mxu0 0.0
  %389 = vmatprep.subr.mxu0 0.0
  %390 = vmatpush2.msra.mxu0 0.0
  %391 = vmatprep.subr.mxu0 0.0
  %392 = vmatpush2.msra.mxu0 0.0
  %393 = vmatprep.mubr.f32.mxu0 0.0
  %394 = vmatmul.mubr.f32.gmra.mxu0 %v58
  %v395 = vpop.f32.mrf.mxu0
  %v396 = vadd.f32 0.0, %v395
  %v397 = vpop.f32.mrf.mxu0
  %v398 = vadd.f32 0.0, %v397
  %399 = vdwg.mxu0
  %400 = vmatprep.subr.mxu0 %v328
  %401 = vmatpush1.msra.mxu0 %v327
  %402 = vmatprep.subr.mxu0 %v324
  %403 = vmatpush1.msra.mxu0 %v323
  %404 = vmatprep.subr.mxu0 %v320
  %405 = vmatpush1.msra.mxu0 %v319
  %406 = vmatprep.subr.mxu0 %v316
  %407 = vmatpush1.msra.mxu0 %v315
  %408 = vmatprep.subr.mxu0 %v312
  %409 = vmatpush1.msra.mxu0 %v311
  %410 = vmatprep.subr.mxu0 %v308
  %411 = vmatpush1.msra.mxu0 %v307
  %412 = vmatprep.subr.mxu0 %v304
  %413 = vmatpush1.msra.mxu0 %v303
  %414 = vmatprep.subr.mxu0 %v300
  %415 = vmatpush1.msra.mxu0 %v299
  %416 = vmatprep.subr.mxu0 %v296
  %417 = vmatpush1.msra.mxu0 %v295
  %418 = vmatprep.subr.mxu0 %v292
  %419 = vmatpush1.msra.mxu0 %v291
  %420 = vmatprep.subr.mxu0 %v288
  %421 = vmatpush1.msra.mxu0 %v287
  %422 = vmatprep.subr.mxu0 %v284
  %423 = vmatpush1.msra.mxu0 %v283
  %424 = vmatprep.subr.mxu0 %v280
  %425 = vmatpush1.msra.mxu0 %v279
  %426 = vmatprep.subr.mxu0 %v276
  %427 = vmatpush1.msra.mxu0 %v275
  %428 = vmatprep.subr.mxu0 %v272
  %429 = vmatpush1.msra.mxu0 %v271
  %430 = vmatprep.subr.mxu0 %v268
  %431 = vmatpush1.msra.mxu0 %v267
  %432 = vmatprep.subr.mxu0 0.0
  %433 = vmatpush2.msra.mxu0 0.0
  %434 = vmatprep.subr.mxu0 0.0
  %435 = vmatpush2.msra.mxu0 0.0
  %436 = vmatprep.subr.mxu0 0.0
  %437 = vmatpush2.msra.mxu0 0.0
  %438 = vmatprep.subr.mxu0 0.0
  %439 = vmatpush2.msra.mxu0 0.0
  %440 = vmatprep.subr.mxu0 0.0
  %441 = vmatpush2.msra.mxu0 0.0
  %442 = vmatprep.subr.mxu0 0.0
  %443 = vmatpush2.msra.mxu0 0.0
  %444 = vmatprep.subr.mxu0 0.0
  %445 = vmatpush2.msra.mxu0 0.0
  %446 = vmatprep.subr.mxu0 0.0
  %447 = vmatpush2.msra.mxu0 0.0
  %448 = vmatprep.subr.mxu0 0.0
  %449 = vmatpush2.msra.mxu0 0.0
  %450 = vmatprep.subr.mxu0 0.0
  %451 = vmatpush2.msra.mxu0 0.0
  %452 = vmatprep.subr.mxu0 0.0
  %453 = vmatpush2.msra.mxu0 0.0
  %454 = vmatprep.subr.mxu0 0.0
  %455 = vmatpush2.msra.mxu0 0.0
  %456 = vmatprep.subr.mxu0 0.0
  %457 = vmatpush2.msra.mxu0 0.0
  %458 = vmatprep.subr.mxu0 0.0
  %459 = vmatpush2.msra.mxu0 0.0
  %460 = vmatprep.subr.mxu0 0.0
  %461 = vmatpush2.msra.mxu0 0.0
  %462 = vmatprep.subr.mxu0 0.0
  %463 = vmatpush2.msra.mxu0 0.0
  %464 = vmatprep.mubr.f32.mxu0 0.0
  %465 = vmatmul.mubr.f32.gmra.mxu0 %v58
  %v466 = vpop.f32.mrf.mxu0
  %v467 = vadd.f32 0.0, %v466
  %v468 = vpop.f32.mrf.mxu0
  %v469 = vadd.f32 0.0, %v468
  %470 = vdwg.mxu0
  %v471 = vmul.f32 %v190, %v396
  %v472 = vmul.f32 %v192, %v398
  %v473 = vmul.f32 %v261, %v467
  %v474 = vmul.f32 %v263, %v469
  %v475 = vld [vmem:[%s1] sm:$0xff]
  %v476 = vld [vmem:[%s4] sm:$0xf]
  %v477 = vld [vmem:[%s5] sm:$0x1]
  %v479 = vlaneseq
  %v480 = vshrl.u32 %v479, 7
  %v481 = vsub.s32 0, %v480
  %v482 = vrot.slane %v477, %v481
  %vm484 = vcmask 31744
  %v486 = vsel %vm484, %v475, 0
  %vm488 = vcmask 1043456
  %v490 = vsel %vm488, %v476, 0
  %492 = vmatprep.subr.mxu0 0.0
  %493 = vmatpush1.msra.mxu0 0.0
  %494 = vmatprep.subr.mxu0 0.0
  %495 = vmatpush1.msra.mxu0 0.0
  %496 = vmatprep.subr.mxu0 0.0
  %497 = vmatpush1.msra.mxu0 0.0
  %498 = vmatprep.subr.mxu0 0.0
  %499 = vmatpush1.msra.mxu0 0.0
  %500 = vmatprep.subr.mxu0 0.0
  %501 = vmatpush1.msra.mxu0 0.0
  %502 = vmatprep.subr.mxu0 0.0
  %503 = vmatpush1.msra.mxu0 0.0
  %504 = vmatprep.subr.mxu0 0.0
  %505 = vmatpush1.msra.mxu0 0.0
  %506 = vmatprep.subr.mxu0 0.0
  %507 = vmatpush1.msra.mxu0 0.0
  %508 = vmatprep.subr.mxu0 0.0
  %509 = vmatpush1.msra.mxu0 0.0
  %510 = vmatprep.subr.mxu0 0.0
  %511 = vmatpush1.msra.mxu0 0.0
  %512 = vmatprep.subr.mxu0 0.0
  %513 = vmatpush1.msra.mxu0 0.0
  %514 = vmatprep.subr.mxu0 0.0
  %515 = vmatpush1.msra.mxu0 0.0
  %516 = vmatprep.subr.mxu0 0.0
  %517 = vmatpush1.msra.mxu0 0.0
  %518 = vmatprep.subr.mxu0 0.0
  %519 = vmatpush1.msra.mxu0 0.0
  %520 = vmatprep.subr.mxu0 0.0
  %521 = vmatpush1.msra.mxu0 0.0
  %522 = vmatprep.subr.mxu0 0.0
  %523 = vmatpush1.msra.mxu0 %v490
  %524 = vmatprep.subr.mxu0 0.0
  %525 = vmatpush2.msra.mxu0 0.0
  %526 = vmatprep.subr.mxu0 0.0
  %527 = vmatpush2.msra.mxu0 0.0
  %528 = vmatprep.subr.mxu0 0.0
  %529 = vmatpush2.msra.mxu0 0.0
  %530 = vmatprep.subr.mxu0 0.0
  %531 = vmatpush2.msra.mxu0 0.0
  %532 = vmatprep.subr.mxu0 0.0
  %533 = vmatpush2.msra.mxu0 0.0
  %534 = vmatprep.subr.mxu0 0.0
  %535 = vmatpush2.msra.mxu0 0.0
  %536 = vmatprep.subr.mxu0 0.0
  %537 = vmatpush2.msra.mxu0 0.0
  %538 = vmatprep.subr.mxu0 0.0
  %539 = vmatpush2.msra.mxu0 0.0
  %540 = vmatprep.subr.mxu0 0.0
  %541 = vmatpush2.msra.mxu0 0.0
  %542 = vmatprep.subr.mxu0 0.0
  %543 = vmatpush2.msra.mxu0 0.0
  %544 = vmatprep.subr.mxu0 0.0
  %545 = vmatpush2.msra.mxu0 0.0
  %546 = vmatprep.subr.mxu0 0.0
  %547 = vmatpush2.msra.mxu0 0.0
  %548 = vmatprep.subr.mxu0 0.0
  %549 = vmatpush2.msra.mxu0 0.0
  %550 = vmatprep.subr.mxu0 0.0
  %551 = vmatpush2.msra.mxu0 0.0
  %552 = vmatprep.subr.mxu0 0.0
  %553 = vmatpush2.msra.mxu0 0.0
  %554 = vmatprep.subr.mxu0 0.0
  %555 = vmatpush2.msra.mxu0 0.0
  %556 = vmatprep.mubr.f32.mxu0 0.0
  %557 = vmatmul.mubr.f32.gmra.mxu0 %v486
  %v558 = vpop.f32.mrf.mxu0
  %v559 = vadd.f32 %v482, %v558
  %v560 = vpop.f32.mrf.mxu0
  %561 = vdwg.mxu0
  %v562 = vmax.f32 %v559, 0.0
  %v563 = vld [vmem:[%s6] sm:$0xff]
  %v564 = vld [vmem:[%s6 + $0x8] sm:$0xff]
  %v565 = vld [vmem:[%s6 + $0x10] sm:$0xff]
  %v566 = vld [vmem:[%s6 + $0x18] sm:$0xff]
  %v567 = vld [vmem:[%s7] sm:$0x1]
  %v569 = vlaneseq
  %v570 = vshrl.u32 %v569, 7
  %v571 = vsub.s32 0, %v570
  %v572 = vrot.slane %v567, %v571
  %vm574 = vcmask 261120
  %v576 = vsel %vm574, %v562, 0
  %578 = vmatprep.subr.mxu0 0.0
  %579 = vmatpush1.msra.mxu0 0.0
  %580 = vmatprep.subr.mxu0 0.0
  %581 = vmatpush1.msra.mxu0 0.0
  %582 = vmatprep.subr.mxu0 0.0
  %583 = vmatpush1.msra.mxu0 0.0
  %584 = vmatprep.subr.mxu0 0.0
  %585 = vmatpush1.msra.mxu0 0.0
  %586 = vmatprep.subr.mxu0 0.0
  %587 = vmatpush1.msra.mxu0 0.0
  %588 = vmatprep.subr.mxu0 0.0
  %589 = vmatpush1.msra.mxu0 0.0
  %590 = vmatprep.subr.mxu0 0.0
  %591 = vmatpush1.msra.mxu0 0.0
  %592 = vmatprep.subr.mxu0 0.0
  %593 = vmatpush1.msra.mxu0 0.0
  %594 = vmatprep.subr.mxu0 0.0
  %595 = vmatpush1.msra.mxu0 0.0
  %596 = vmatprep.subr.mxu0 0.0
  %597 = vmatpush1.msra.mxu0 0.0
  %598 = vmatprep.subr.mxu0 0.0
  %599 = vmatpush1.msra.mxu0 0.0
  %600 = vmatprep.subr.mxu0 0.0
  %601 = vmatpush1.msra.mxu0 0.0
  %602 = vmatprep.subr.mxu0 0.0
  %603 = vmatpush1.msra.mxu0 %v566
  %604 = vmatprep.subr.mxu0 0.0
  %605 = vmatpush1.msra.mxu0 %v565
  %606 = vmatprep.subr.mxu0 0.0
  %607 = vmatpush1.msra.mxu0 %v564
  %608 = vmatprep.subr.mxu0 0.0
  %609 = vmatpush1.msra.mxu0 %v563
  %610 = vmatprep.subr.mxu0 0.0
  %611 = vmatpush2.msra.mxu0 0.0
  %612 = vmatprep.subr.mxu0 0.0
  %613 = vmatpush2.msra.mxu0 0.0
  %614 = vmatprep.subr.mxu0 0.0
  %615 = vmatpush2.msra.mxu0 0.0
  %616 = vmatprep.subr.mxu0 0.0
  %617 = vmatpush2.msra.mxu0 0.0
  %618 = vmatprep.subr.mxu0 0.0
  %619 = vmatpush2.msra.mxu0 0.0
  %620 = vmatprep.subr.mxu0 0.0
  %621 = vmatpush2.msra.mxu0 0.0
  %622 = vmatprep.subr.mxu0 0.0
  %623 = vmatpush2.msra.mxu0 0.0
  %624 = vmatprep.subr.mxu0 0.0
  %625 = vmatpush2.msra.mxu0 0.0
  %626 = vmatprep.subr.mxu0 0.0
  %627 = vmatpush2.msra.mxu0 0.0
  %628 = vmatprep.subr.mxu0 0.0
  %629 = vmatpush2.msra.mxu0 0.0
  %630 = vmatprep.subr.mxu0 0.0
  %631 = vmatpush2.msra.mxu0 0.0
  %632 = vmatprep.subr.mxu0 0.0
  %633 = vmatpush2.msra.mxu0 0.0
  %634 = vmatprep.subr.mxu0 0.0
  %635 = vmatpush2.msra.mxu0 0.0
  %636 = vmatprep.subr.mxu0 0.0
  %637 = vmatpush2.msra.mxu0 0.0
  %638 = vmatprep.subr.mxu0 0.0
  %639 = vmatpush2.msra.mxu0 0.0
  %640 = vmatprep.subr.mxu0 0.0
  %641 = vmatpush2.msra.mxu0 0.0
  %642 = vmatprep.mubr.f32.mxu0 0.0
  %643 = vmatmul.mubr.f32.gmra.mxu0 %v576
  %v644 = vpop.f32.mrf.mxu0
  %v645 = vadd.f32 %v572, %v644
  %v646 = vpop.f32.mrf.mxu0
  %647 = vdwg.mxu0
  %v648 = vmax.f32 %v645, 0.0
  %v649 = vld [vmem:[%s8] sm:$0xff]
  %v650 = vld [vmem:[%s8 + $0x8] sm:$0xff]
  %v651 = vld [vmem:[%s8 + $0x10] sm:$0xff]
  %v652 = vld [vmem:[%s8 + $0x18] sm:$0xff]
  %v653 = vld [vmem:[%s8 + $0x20] sm:$0xff]
  %v654 = vld [vmem:[%s8 + $0x28] sm:$0xff]
  %v655 = vld [vmem:[%s8 + $0x30] sm:$0xff]
  %v656 = vld [vmem:[%s8 + $0x38] sm:$0xff]
  %v657 = vld [vmem:[%s8 + $0x40] sm:$0xff]
  %v658 = vld [vmem:[%s8 + $0x48] sm:$0xff]
  %v659 = vld [vmem:[%s8 + $0x50] sm:$0xff]
  %v660 = vld [vmem:[%s8 + $0x58] sm:$0xff]
  %v661 = vld [vmem:[%s8 + $0x60] sm:$0xff]
  %v662 = vld [vmem:[%s8 + $0x68] sm:$0xff]
  %v663 = vld [vmem:[%s8 + $0x70] sm:$0xff]
  %v664 = vld [vmem:[%s8 + $0x78] sm:$0xff]
  %v665 = vld [vmem:[%s8 + $0x80] sm:$0xff]
  %v666 = vld [vmem:[%s8 + $0x88] sm:$0xff]
  %v667 = vld [vmem:[%s8 + $0x90] sm:$0xff]
  %v668 = vld [vmem:[%s8 + $0x98] sm:$0xff]
  %v669 = vld [vmem:[%s8 + $0xa0] sm:$0xff]
  %v670 = vld [vmem:[%s8 + $0xa8] sm:$0xff]
  %v671 = vld [vmem:[%s8 + $0xb0] sm:$0xff]
  %v672 = vld [vmem:[%s8 + $0xb8] sm:$0xff]
  %v673 = vld [vmem:[%s8 + $0xc0] sm:$0xff]
  %v674 = vld [vmem:[%s8 + $0xc8] sm:$0xff]
  %v675 = vld [vmem:[%s8 + $0xd0] sm:$0xff]
  %v676 = vld [vmem:[%s8 + $0xd8] sm:$0xff]
  %v677 = vld [vmem:[%s8 + $0xe0] sm:$0xff]
  %v678 = vld [vmem:[%s8 + $0xe8] sm:$0xff]
  %v679 = vld [vmem:[%s8 + $0xf0] sm:$0xff]
  %v680 = vld [vmem:[%s8 + $0xf8] sm:$0xff]
  %v681 = vld [vmem:[%s8 + $0x100] sm:$0xff]
  %v682 = vld [vmem:[%s8 + $0x108] sm:$0xff]
  %v683 = vld [vmem:[%s8 + $0x110] sm:$0xff]
  %v684 = vld [vmem:[%s8 + $0x118] sm:$0xff]
  %v685 = vld [vmem:[%s8 + $0x120] sm:$0xff]
  %v686 = vld [vmem:[%s8 + $0x128] sm:$0xff]
  %v687 = vld [vmem:[%s8 + $0x130] sm:$0xff]
  %v688 = vld [vmem:[%s8 + $0x138] sm:$0xff]
  %v689 = vld [vmem:[%s8 + $0x140] sm:$0xff]
  %v690 = vld [vmem:[%s8 + $0x148] sm:$0xff]
  %v691 = vld [vmem:[%s8 + $0x150] sm:$0xff]
  %v692 = vld [vmem:[%s8 + $0x158] sm:$0xff]
  %v693 = vld [vmem:[%s8 + $0x160] sm:$0xff]
  %v694 = vld [vmem:[%s8 + $0x168] sm:$0xff]
  %v695 = vld [vmem:[%s8 + $0x170] sm:$0xff]
  %v696 = vld [vmem:[%s8 + $0x178] sm:$0xff]
  %v697 = vld [vmem:[%s8 + $0x180] sm:$0xff]
  %v698 = vld [vmem:[%s8 + $0x188] sm:$0xff]
  %v699 = vld [vmem:[%s8 + $0x190] sm:$0xff]
  %v700 = vld [vmem:[%s8 + $0x198] sm:$0xff]
  %v701 = vld [vmem:[%s8 + $0x1a0] sm:$0xff]
  %v702 = vld [vmem:[%s8 + $0x1a8] sm:$0xff]
  %v703 = vld [vmem:[%s8 + $0x1b0] sm:$0xff]
  %v704 = vld [vmem:[%s8 + $0x1b8] sm:$0xff]
  %v705 = vld [vmem:[%s8 + $0x1c0] sm:$0xff]
  %v706 = vld [vmem:[%s8 + $0x1c8] sm:$0xff]
  %v707 = vld [vmem:[%s8 + $0x1d0] sm:$0xff]
  %v708 = vld [vmem:[%s8 + $0x1d8] sm:$0xff]
  %v709 = vld [vmem:[%s8 + $0x1e0] sm:$0xff]
  %v710 = vld [vmem:[%s8 + $0x1e8] sm:$0xff]
  %v711 = vld [vmem:[%s8 + $0x1f0] sm:$0xff]
  %v712 = vld [vmem:[%s8 + $0x1f8] sm:$0xff]
  %v713 = vld [vmem:[%s8 + $0x200] sm:$0xff]
  %v714 = vld [vmem:[%s8 + $0x208] sm:$0xff]
  %v715 = vld [vmem:[%s8 + $0x210] sm:$0xff]
  %v716 = vld [vmem:[%s8 + $0x218] sm:$0xff]
  %v717 = vld [vmem:[%s8 + $0x220] sm:$0xff]
  %v718 = vld [vmem:[%s8 + $0x228] sm:$0xff]
  %v719 = vld [vmem:[%s8 + $0x230] sm:$0xff]
  %v720 = vld [vmem:[%s8 + $0x238] sm:$0xff]
  %v721 = vld [vmem:[%s8 + $0x240] sm:$0xff]
  %v722 = vld [vmem:[%s8 + $0x248] sm:$0xff]
  %v723 = vld [vmem:[%s8 + $0x250] sm:$0xff]
  %v724 = vld [vmem:[%s8 + $0x258] sm:$0xff]
  %v725 = vld [vmem:[%s8 + $0x260] sm:$0xff]
  %v726 = vld [vmem:[%s8 + $0x268] sm:$0xff]
  %v727 = vld [vmem:[%s8 + $0x270] sm:$0xff]
  %v728 = vld [vmem:[%s8 + $0x278] sm:$0xff]
  %v729 = vld [vmem:[%s8 + $0x280] sm:$0xff]
  %v730 = vld [vmem:[%s8 + $0x288] sm:$0xff]
  %v731 = vld [vmem:[%s8 + $0x290] sm:$0xff]
  %v732 = vld [vmem:[%s8 + $0x298] sm:$0xff]
  %v733 = vld [vmem:[%s8 + $0x2a0] sm:$0xff]
  %v734 = vld [vmem:[%s8 + $0x2a8] sm:$0xff]
  %v735 = vld [vmem:[%s8 + $0x2b0] sm:$0xff]
  %v736 = vld [vmem:[%s8 + $0x2b8] sm:$0xff]
  %v737 = vld [vmem:[%s8 + $0x2c0] sm:$0xff]
  %v738 = vld [vmem:[%s8 + $0x2c8] sm:$0xff]
  %v739 = vld [vmem:[%s8 + $0x2d0] sm:$0xff]
  %v740 = vld [vmem:[%s8 + $0x2d8] sm:$0xff]
  %v741 = vld [vmem:[%s8 + $0x2e0] sm:$0xff]
  %v742 = vld [vmem:[%s8 + $0x2e8] sm:$0xff]
  %v743 = vld [vmem:[%s8 + $0x2f0] sm:$0xff]
  %v744 = vld [vmem:[%s8 + $0x2f8] sm:$0xff]
  %v745 = vld [vmem:[%s8 + $0x300] sm:$0xff]
  %v746 = vld [vmem:[%s8 + $0x308] sm:$0xff]
  %v747 = vld [vmem:[%s8 + $0x310] sm:$0xff]
  %v748 = vld [vmem:[%s8 + $0x318] sm:$0xff]
  %v749 = vld [vmem:[%s8 + $0x320] sm:$0xff]
  %v750 = vld [vmem:[%s8 + $0x328] sm:$0xff]
  %v751 = vld [vmem:[%s8 + $0x330] sm:$0xff]
  %v752 = vld [vmem:[%s8 + $0x338] sm:$0xff]
  %v753 = vld [vmem:[%s8 + $0x340] sm:$0xff]
  %v754 = vld [vmem:[%s8 + $0x348] sm:$0xff]
  %v755 = vld [vmem:[%s8 + $0x350] sm:$0xff]
  %v756 = vld [vmem:[%s8 + $0x358] sm:$0xff]
  %v757 = vld [vmem:[%s8 + $0x360] sm:$0xff]
  %v758 = vld [vmem:[%s8 + $0x368] sm:$0xff]
  %v759 = vld [vmem:[%s8 + $0x370] sm:$0xff]
  %v760 = vld [vmem:[%s8 + $0x378] sm:$0xff]
  %v761 = vld [vmem:[%s9] sm:$0x3]
  %v763 = vlaneseq
  %v764 = vshrl.u32 %v763, 7
  %v765 = vsub.s32 0, %v764
  %v766 = vrot.slane %v761, %v765
  %v767 = vlaneseq
  %v768 = vshrl.u32 %v767, 7
  %v769 = vsub.s32 1, %v768
  %v770 = vrot.slane %v761, %v769
  %vm773 = vcmask 523264
  %v775 = vsel %vm773, %v474, 0
  %777 = vmatprep.subr.mxu0 %v680
  %778 = vmatpush1.msra.mxu0 %v679
  %779 = vmatprep.subr.mxu0 %v678
  %780 = vmatpush1.msra.mxu0 %v677
  %781 = vmatprep.subr.mxu0 %v676
  %782 = vmatpush1.msra.mxu0 %v675
  %783 = vmatprep.subr.mxu0 %v674
  %784 = vmatpush1.msra.mxu0 %v673
  %785 = vmatprep.subr.mxu0 %v672
  %786 = vmatpush1.msra.mxu0 %v671
  %787 = vmatprep.subr.mxu0 %v670
  %788 = vmatpush1.msra.mxu0 %v669
  %789 = vmatprep.subr.mxu0 %v668
  %790 = vmatpush1.msra.mxu0 %v667
  %791 = vmatprep.subr.mxu0 %v666
  %792 = vmatpush1.msra.mxu0 %v665
  %793 = vmatprep.subr.mxu0 %v664
  %794 = vmatpush1.msra.mxu0 %v663
  %795 = vmatprep.subr.mxu0 %v662
  %796 = vmatpush1.msra.mxu0 %v661
  %797 = vmatprep.subr.mxu0 %v660
  %798 = vmatpush1.msra.mxu0 %v659
  %799 = vmatprep.subr.mxu0 %v658
  %800 = vmatpush1.msra.mxu0 %v657
  %801 = vmatprep.subr.mxu0 %v656
  %802 = vmatpush1.msra.mxu0 %v655
  %803 = vmatprep.subr.mxu0 %v654
  %804 = vmatpush1.msra.mxu0 %v653
  %805 = vmatprep.subr.mxu0 %v652
  %806 = vmatpush1.msra.mxu0 %v651
  %807 = vmatprep.subr.mxu0 %v650
  %808 = vmatpush1.msra.mxu0 %v649
  %809 = vmatprep.subr.mxu0 %v712
  %810 = vmatpush2.msra.mxu0 %v711
  %811 = vmatprep.subr.mxu0 %v710
  %812 = vmatpush2.msra.mxu0 %v709
  %813 = vmatprep.subr.mxu0 %v708
  %814 = vmatpush2.msra.mxu0 %v707
  %815 = vmatprep.subr.mxu0 %v706
  %816 = vmatpush2.msra.mxu0 %v705
  %817 = vmatprep.subr.mxu0 %v704
  %818 = vmatpush2.msra.mxu0 %v703
  %819 = vmatprep.subr.mxu0 %v702
  %820 = vmatpush2.msra.mxu0 %v701
  %821 = vmatprep.subr.mxu0 %v700
  %822 = vmatpush2.msra.mxu0 %v699
  %823 = vmatprep.subr.mxu0 %v698
  %824 = vmatpush2.msra.mxu0 %v697
  %825 = vmatprep.subr.mxu0 %v696
  %826 = vmatpush2.msra.mxu0 %v695
  %827 = vmatprep.subr.mxu0 %v694
  %828 = vmatpush2.msra.mxu0 %v693
  %829 = vmatprep.subr.mxu0 %v692
  %830 = vmatpush2.msra.mxu0 %v691
  %831 = vmatprep.subr.mxu0 %v690
  %832 = vmatpush2.msra.mxu0 %v689
  %833 = vmatprep.subr.mxu0 %v688
  %834 = vmatpush2.msra.mxu0 %v687
  %835 = vmatprep.subr.mxu0 %v686
  %836 = vmatpush2.msra.mxu0 %v685
  %837 = vmatprep.subr.mxu0 %v684
  %838 = vmatpush2.msra.mxu0 %v683
  %839 = vmatprep.subr.mxu0 %v682
  %840 = vmatpush2.msra.mxu0 %v681
  %841 = vmatprep.mubr.f32.mxu0 %v472
  %842 = vmatmul.mubr.f32.gmra.mxu0 %v471
  %v843 = vpop.f32.mrf.mxu0
  %v844 = vadd.f32 %v766, %v843
  %v845 = vpop.f32.mrf.mxu0
  %v846 = vadd.f32 %v770, %v845
  %847 = vdwg.mxu0
  %848 = vmatprep.subr.mxu0 %v744
  %849 = vmatpush1.msra.mxu0 %v743
  %850 = vmatprep.subr.mxu0 %v742
  %851 = vmatpush1.msra.mxu0 %v741
  %852 = vmatprep.subr.mxu0 %v740
  %853 = vmatpush1.msra.mxu0 %v739
  %854 = vmatprep.subr.mxu0 %v738
  %855 = vmatpush1.msra.mxu0 %v737
  %856 = vmatprep.subr.mxu0 %v736
  %857 = vmatpush1.msra.mxu0 %v735
  %858 = vmatprep.subr.mxu0 %v734
  %859 = vmatpush1.msra.mxu0 %v733
  %860 = vmatprep.subr.mxu0 %v732
  %861 = vmatpush1.msra.mxu0 %v731
  %862 = vmatprep.subr.mxu0 %v730
  %863 = vmatpush1.msra.mxu0 %v729
  %864 = vmatprep.subr.mxu0 %v728
  %865 = vmatpush1.msra.mxu0 %v727
  %866 = vmatprep.subr.mxu0 %v726
  %867 = vmatpush1.msra.mxu0 %v725
  %868 = vmatprep.subr.mxu0 %v724
  %869 = vmatpush1.msra.mxu0 %v723
  %870 = vmatprep.subr.mxu0 %v722
  %871 = vmatpush1.msra.mxu0 %v721
  %872 = vmatprep.subr.mxu0 %v720
  %873 = vmatpush1.msra.mxu0 %v719
  %874 = vmatprep.subr.mxu0 %v718
  %875 = vmatpush1.msra.mxu0 %v717
  %876 = vmatprep.subr.mxu0 %v716
  %877 = vmatpush1.msra.mxu0 %v715
  %878 = vmatprep.subr.mxu0 %v714
  %879 = vmatpush1.msra.mxu0 %v713
  %880 = vmatprep.subr.mxu0 0.0
  %881 = vmatpush2.msra.mxu0 0.0
  %882 = vmatprep.subr.mxu0 0.0
  %883 = vmatpush2.msra.mxu0 0.0
  %884 = vmatprep.subr.mxu0 0.0
  %885 = vmatpush2.msra.mxu0 0.0
  %886 = vmatprep.subr.mxu0 0.0
  %887 = vmatpush2.msra.mxu0 0.0
  %888 = vmatprep.subr.mxu0 0.0
  %889 = vmatpush2.msra.mxu0 0.0
  %890 = vmatprep.subr.mxu0 0.0
  %891 = vmatpush2.msra.mxu0 0.0
  %892 = vmatprep.subr.mxu0 0.0
  %893 = vmatpush2.msra.mxu0 0.0
  %894 = vmatprep.subr.mxu0 0.0
  %895 = vmatpush2.msra.mxu0 0.0
  %896 = vmatprep.subr.mxu0 %v760
  %897 = vmatpush2.msra.mxu0 %v759
  %898 = vmatprep.subr.mxu0 %v758
  %899 = vmatpush2.msra.mxu0 %v757
  %900 = vmatprep.subr.mxu0 %v756
  %901 = vmatpush2.msra.mxu0 %v755
  %902 = vmatprep.subr.mxu0 %v754
  %903 = vmatpush2.msra.mxu0 %v753
  %904 = vmatprep.subr.mxu0 %v752
  %905 = vmatpush2.msra.mxu0 %v751
  %906 = vmatprep.subr.mxu0 %v750
  %907 = vmatpush2.msra.mxu0 %v749
  %908 = vmatprep.subr.mxu0 %v748
  %909 = vmatpush2.msra.mxu0 %v747
  %910 = vmatprep.subr.mxu0 %v746
  %911 = vmatpush2.msra.mxu0 %v745
  %912 = vmatprep.mubr.f32.mxu0 %v775
  %913 = vmatmul.mubr.f32.gmra.mxu0 %v473
  %v914 = vpop.f32.mrf.mxu0
  %v915 = vadd.f32 %v844, %v914
  %v916 = vpop.f32.mrf.mxu0
  %v917 = vadd.f32 %v846, %v916
  %918 = vdwg.mxu0
  %v919 = vmax.f32 %v915, 0.0
  %v920 = vmax.f32 %v917, 0.0
  %v921 = vld [vmem:[%s10] sm:$0xff]
  %v922 = vld [vmem:[%s10 + $0x8] sm:$0xff]
  %v923 = vld [vmem:[%s10 + $0x10] sm:$0xff]
  %v924 = vld [vmem:[%s10 + $0x18] sm:$0xff]
  %v925 = vld [vmem:[%s10 + $0x20] sm:$0xff]
  %v926 = vld [vmem:[%s10 + $0x28] sm:$0xff]
  %v927 = vld [vmem:[%s10 + $0x30] sm:$0xff]
  %v928 = vld [vmem:[%s10 + $0x38] sm:$0xff]
  %v929 = vld [vmem:[%s10 + $0x40] sm:$0xff]
  %v930 = vld [vmem:[%s10 + $0x48] sm:$0xff]
  %v931 = vld [vmem:[%s10 + $0x50] sm:$0xff]
  %v932 = vld [vmem:[%s10 + $0x58] sm:$0xff]
  %v933 = vld [vmem:[%s10 + $0x60] sm:$0xff]
  %v934 = vld [vmem:[%s10 + $0x68] sm:$0xff]
  %v935 = vld [vmem:[%s10 + $0x70] sm:$0xff]
  %v936 = vld [vmem:[%s10 + $0x78] sm:$0xff]
  %v937 = vld [vmem:[%s10 + $0x80] sm:$0xff]
  %v938 = vld [vmem:[%s10 + $0x88] sm:$0xff]
  %v939 = vld [vmem:[%s10 + $0x90] sm:$0xff]
  %v940 = vld [vmem:[%s10 + $0x98] sm:$0xff]
  %v941 = vld [vmem:[%s10 + $0xa0] sm:$0xff]
  %v942 = vld [vmem:[%s10 + $0xa8] sm:$0xff]
  %v943 = vld [vmem:[%s10 + $0xb0] sm:$0xff]
  %v944 = vld [vmem:[%s10 + $0xb8] sm:$0xff]
  %v945 = vld [vmem:[%s10 + $0xc0] sm:$0xff]
  %v946 = vld [vmem:[%s10 + $0xc8] sm:$0xff]
  %v947 = vld [vmem:[%s10 + $0xd0] sm:$0xff]
  %v948 = vld [vmem:[%s10 + $0xd8] sm:$0xff]
  %v949 = vld [vmem:[%s11] sm:$0x1]
  %v951 = vlaneseq
  %v952 = vshrl.u32 %v951, 7
  %v953 = vsub.s32 0, %v952
  %v954 = vrot.slane %v949, %v953
  %vm956 = vcmask 785408
  %v958 = vsel %vm956, %v920, 0
  %960 = vmatprep.subr.mxu0 0.0
  %961 = vmatpush1.msra.mxu0 %v936
  %962 = vmatprep.subr.mxu0 0.0
  %963 = vmatpush1.msra.mxu0 %v935
  %964 = vmatprep.subr.mxu0 0.0
  %965 = vmatpush1.msra.mxu0 %v934
  %966 = vmatprep.subr.mxu0 0.0
  %967 = vmatpush1.msra.mxu0 %v933
  %968 = vmatprep.subr.mxu0 0.0
  %969 = vmatpush1.msra.mxu0 %v932
  %970 = vmatprep.subr.mxu0 0.0
  %971 = vmatpush1.msra.mxu0 %v931
  %972 = vmatprep.subr.mxu0 0.0
  %973 = vmatpush1.msra.mxu0 %v930
  %974 = vmatprep.subr.mxu0 0.0
  %975 = vmatpush1.msra.mxu0 %v929
  %976 = vmatprep.subr.mxu0 0.0
  %977 = vmatpush1.msra.mxu0 %v928
  %978 = vmatprep.subr.mxu0 0.0
  %979 = vmatpush1.msra.mxu0 %v927
  %980 = vmatprep.subr.mxu0 0.0
  %981 = vmatpush1.msra.mxu0 %v926
  %982 = vmatprep.subr.mxu0 0.0
  %983 = vmatpush1.msra.mxu0 %v925
  %984 = vmatprep.subr.mxu0 0.0
  %985 = vmatpush1.msra.mxu0 %v924
  %986 = vmatprep.subr.mxu0 0.0
  %987 = vmatpush1.msra.mxu0 %v923
  %988 = vmatprep.subr.mxu0 0.0
  %989 = vmatpush1.msra.mxu0 %v922
  %990 = vmatprep.subr.mxu0 0.0
  %991 = vmatpush1.msra.mxu0 %v921
  %992 = vmatprep.subr.mxu0 0.0
  %993 = vmatpush2.msra.mxu0 0.0
  %994 = vmatprep.subr.mxu0 0.0
  %995 = vmatpush2.msra.mxu0 0.0
  %996 = vmatprep.subr.mxu0 0.0
  %997 = vmatpush2.msra.mxu0 0.0
  %998 = vmatprep.subr.mxu0 0.0
  %999 = vmatpush2.msra.mxu0 0.0
  %1000 = vmatprep.subr.mxu0 0.0
  %1001 = vmatpush2.msra.mxu0 %v948
  %1002 = vmatprep.subr.mxu0 0.0
  %1003 = vmatpush2.msra.mxu0 %v947
  %1004 = vmatprep.subr.mxu0 0.0
  %1005 = vmatpush2.msra.mxu0 %v946
  %1006 = vmatprep.subr.mxu0 0.0
  %1007 = vmatpush2.msra.mxu0 %v945
  %1008 = vmatprep.subr.mxu0 0.0
  %1009 = vmatpush2.msra.mxu0 %v944
  %1010 = vmatprep.subr.mxu0 0.0
  %1011 = vmatpush2.msra.mxu0 %v943
  %1012 = vmatprep.subr.mxu0 0.0
  %1013 = vmatpush2.msra.mxu0 %v942
  %1014 = vmatprep.subr.mxu0 0.0
  %1015 = vmatpush2.msra.mxu0 %v941
  %1016 = vmatprep.subr.mxu0 0.0
  %1017 = vmatpush2.msra.mxu0 %v940
  %1018 = vmatprep.subr.mxu0 0.0
  %1019 = vmatpush2.msra.mxu0 %v939
  %1020 = vmatprep.subr.mxu0 0.0
  %1021 = vmatpush2.msra.mxu0 %v938
  %1022 = vmatprep.subr.mxu0 0.0
  %1023 = vmatpush2.msra.mxu0 %v937
  %1024 = vmatprep.mubr.f32.mxu0 %v958
  %1025 = vmatmul.mubr.f32.gmra.mxu0 %v919
  %v1026 = vpop.f32.mrf.mxu0
  %v1027 = vadd.f32 %v954, %v1026
  %v1028 = vpop.f32.mrf.mxu0
  %1029 = vdwg.mxu0
  %vm1030 = vcmask 228352
  %v1031 = vsel %vm1030, %v1027, -inf
  %1032 = vmax.xlane.f32.xlu0 %v1031
  %v1033 = vpop.xlane.xlu0 %1032
  %v1034 = vsub.f32 %v1027, %v1033
  %v1035 = vmul.f32 %v1034, 1.442695
  %v1036 = vpow.pop %v1035
  %v1037 = vsel %vm1030, %v1036, 0.0
  %1038 = vadd.xlane.f32.xlu0 %v1037
  %v1039 = vpop.xlane.xlu0 %1038
  %v1040 = vrcp.pop %v1039
  %v1041 = vmul.f32 %v1036, %v1040
  %v1042 = vld [vmem:[%s12] sm:$0xff]
  %v1043 = vld [vmem:[%s12 + $0x8] sm:$0xff]
  %v1044 = vld [vmem:[%s12 + $0x10] sm:$0xff]
  %v1045 = vld [vmem:[%s12 + $0x18] sm:$0xff]
  %v1046 = vld [vmem:[%s12 + $0x20] sm:$0xff]
  %v1047 = vld [vmem:[%s12 + $0x28] sm:$0xff]
  %v1048 = vld [vmem:[%s12 + $0x30] sm:$0xff]
  %v1049 = vld [vmem:[%s12 + $0x38] sm:$0xff]
  %v1050 = vld [vmem:[%s12 + $0x40] sm:$0xff]
  %v1051 = vld [vmem:[%s12 + $0x48] sm:$0xff]
  %v1052 = vld [vmem:[%s12 + $0x50] sm:$0xff]
  %v1053 = vld [vmem:[%s12 + $0x58] sm:$0xff]
  %v1054 = vld [vmem:[%s12 + $0x60] sm:$0xf]
  %v1055 = vld [vmem:[%s12 + $0x68] sm:$0xf]
  %v1056 = vld [vmem:[%s12 + $0x70] sm:$0xf]
  %v1057 = vld [vmem:[%s12 + $0x78] sm:$0xf]
  %v1059 = vsel %vm1030, %v1041, 0
  %v1062 = vsel %vm488, %v1054, 0
  %v1065 = vsel %vm488, %v1055, 0
  %v1068 = vsel %vm488, %v1056, 0
  %v1071 = vsel %vm488, %v1057, 0
  %1073 = vmatprep.subr.mxu0 0.0
  %1074 = vmatpush1.msra.mxu0 0.0
  %1075 = vmatprep.subr.mxu0 0.0
  %1076 = vmatpush1.msra.mxu0 0.0
  %1077 = vmatprep.subr.mxu0 0.0
  %1078 = vmatpush1.msra.mxu0 0.0
  %1079 = vmatprep.subr.mxu0 0.0
  %1080 = vmatpush1.msra.mxu0 0.0
  %1081 = vmatprep.subr.mxu0 0.0
  %1082 = vmatpush1.msra.mxu0 0.0
  %1083 = vmatprep.subr.mxu0 0.0
  %1084 = vmatpush1.msra.mxu0 0.0
  %1085 = vmatprep.subr.mxu0 0.0
  %1086 = vmatpush1.msra.mxu0 0.0
  %1087 = vmatprep.subr.mxu0 0.0
  %1088 = vmatpush1.msra.mxu0 0.0
  %1089 = vmatprep.subr.mxu0 0.0
  %1090 = vmatpush1.msra.mxu0 0.0
  %1091 = vmatprep.subr.mxu0 0.0
  %1092 = vmatpush1.msra.mxu0 0.0
  %1093 = vmatprep.subr.mxu0 0.0
  %1094 = vmatpush1.msra.mxu0 0.0
  %1095 = vmatprep.subr.mxu0 0.0
  %1096 = vmatpush1.msra.mxu0 0.0
  %1097 = vmatprep.subr.mxu0 %v1065
  %1098 = vmatpush1.msra.mxu0 %v1062
  %1099 = vmatprep.subr.mxu0 %v1051
  %1100 = vmatpush1.msra.mxu0 %v1050
  %1101 = vmatprep.subr.mxu0 %v1047
  %1102 = vmatpush1.msra.mxu0 %v1046
  %1103 = vmatprep.subr.mxu0 %v1043
  %1104 = vmatpush1.msra.mxu0 %v1042
  %1105 = vmatprep.subr.mxu0 0.0
  %1106 = vmatpush2.msra.mxu0 0.0
  %1107 = vmatprep.subr.mxu0 0.0
  %1108 = vmatpush2.msra.mxu0 0.0
  %1109 = vmatprep.subr.mxu0 0.0
  %1110 = vmatpush2.msra.mxu0 0.0
  %1111 = vmatprep.subr.mxu0 0.0
  %1112 = vmatpush2.msra.mxu0 0.0
  %1113 = vmatprep.subr.mxu0 0.0
  %1114 = vmatpush2.msra.mxu0 0.0
  %1115 = vmatprep.subr.mxu0 0.0
  %1116 = vmatpush2.msra.mxu0 0.0
  %1117 = vmatprep.subr.mxu0 0.0
  %1118 = vmatpush2.msra.mxu0 0.0
  %1119 = vmatprep.subr.mxu0 0.0
  %1120 = vmatpush2.msra.mxu0 0.0
  %1121 = vmatprep.subr.mxu0 0.0
  %1122 = vmatpush2.msra.mxu0 0.0
  %1123 = vmatprep.subr.mxu0 0.0
  %1124 = vmatpush2.msra.mxu0 0.0
  %1125 = vmatprep.subr.mxu0 0.0
  %1126 = vmatpush2.msra.mxu0 0.0
  %1127 = vmatprep.subr.mxu0 0.0
  %1128 = vmatpush2.msra.mxu0 0.0
  %1129 = vmatprep.subr.mxu0 0.0
  %1130 = vmatpush2.msra.mxu0 0.0
  %1131 = vmatprep.subr.mxu0 0.0
  %1132 = vmatpush2.msra.mxu0 0.0
  %1133 = vmatprep.subr.mxu0 0.0
  %1134 = vmatpush2.msra.mxu0 0.0
  %1135 = vmatprep.subr.mxu0 0.0
  %1136 = vmatpush2.msra.mxu0 0.0
  %1137 = vmatprep.mubr.f32.mxu0 0.0
  %1138 = vmatmul.mubr.f32.gmra.mxu0 %v1059
  %v1139 = vpop.f32.mrf.mxu0
  %v1140 = vadd.f32 0.0, %v1139
  %v1141 = vpop.f32.mrf.mxu0
  %v1142 = vadd.f32 0.0, %v1141
  %1143 = vdwg.mxu0
  %1144 = vmatprep.subr.mxu0 0.0
  %1145 = vmatpush1.msra.mxu0 0.0
  %1146 = vmatprep.subr.mxu0 0.0
  %1147 = vmatpush1.msra.mxu0 0.0
  %1148 = vmatprep.subr.mxu0 0.0
  %1149 = vmatpush1.msra.mxu0 0.0
  %1150 = vmatprep.subr.mxu0 0.0
  %1151 = vmatpush1.msra.mxu0 0.0
  %1152 = vmatprep.subr.mxu0 0.0
  %1153 = vmatpush1.msra.mxu0 0.0
  %1154 = vmatprep.subr.mxu0 0.0
  %1155 = vmatpush1.msra.mxu0 0.0
  %1156 = vmatprep.subr.mxu0 0.0
  %1157 = vmatpush1.msra.mxu0 0.0
  %1158 = vmatprep.subr.mxu0 0.0
  %1159 = vmatpush1.msra.mxu0 0.0
  %1160 = vmatprep.subr.mxu0 0.0
  %1161 = vmatpush1.msra.mxu0 0.0
  %1162 = vmatprep.subr.mxu0 0.0
  %1163 = vmatpush1.msra.mxu0 0.0
  %1164 = vmatprep.subr.mxu0 0.0
  %1165 = vmatpush1.msra.mxu0 0.0
  %1166 = vmatprep.subr.mxu0 0.0
  %1167 = vmatpush1.msra.mxu0 0.0
  %1168 = vmatprep.subr.mxu0 %v1071
  %1169 = vmatpush1.msra.mxu0 %v1068
  %1170 = vmatprep.subr.mxu0 %v1053
  %1171 = vmatpush1.msra.mxu0 %v1052
  %1172 = vmatprep.subr.mxu0 %v1049
  %1173 = vmatpush1.msra.mxu0 %v1048
  %1174 = vmatprep.subr.mxu0 %v1045
  %1175 = vmatpush1.msra.mxu0 %v1044
  %1176 = vmatprep.subr.mxu0 0.0
  %1177 = vmatpush2.msra.mxu0 0.0
  %1178 = vmatprep.subr.mxu0 0.0
  %1179 = vmatpush2.msra.mxu0 0.0
  %1180 = vmatprep.subr.mxu0 0.0
  %1181 = vmatpush2.msra.mxu0 0.0
  %1182 = vmatprep.subr.mxu0 0.0
  %1183 = vmatpush2.msra.mxu0 0.0
  %1184 = vmatprep.subr.mxu0 0.0
  %1185 = vmatpush2.msra.mxu0 0.0
  %1186 = vmatprep.subr.mxu0 0.0
  %1187 = vmatpush2.msra.mxu0 0.0
  %1188 = vmatprep.subr.mxu0 0.0
  %1189 = vmatpush2.msra.mxu0 0.0
  %1190 = vmatprep.subr.mxu0 0.0
  %1191 = vmatpush2.msra.mxu0 0.0
  %1192 = vmatprep.subr.mxu0 0.0
  %1193 = vmatpush2.msra.mxu0 0.0
  %1194 = vmatprep.subr.mxu0 0.0
  %1195 = vmatpush2.msra.mxu0 0.0
  %1196 = vmatprep.subr.mxu0 0.0
  %1197 = vmatpush2.msra.mxu0 0.0
  %1198 = vmatprep.subr.mxu0 0.0
  %1199 = vmatpush2.msra.mxu0 0.0
  %1200 = vmatprep.subr.mxu0 0.0
  %1201 = vmatpush2.msra.mxu0 0.0
  %1202 = vmatprep.subr.mxu0 0.0
  %1203 = vmatpush2.msra.mxu0 0.0
  %1204 = vmatprep.subr.mxu0 0.0
  %1205 = vmatpush2.msra.mxu0 0.0
  %1206 = vmatprep.subr.mxu0 0.0
  %1207 = vmatpush2.msra.mxu0 0.0
  %1208 = vmatprep.mubr.f32.mxu0 0.0
  %1209 = vmatmul.mubr.f32.gmra.mxu0 %v1059
  %v1210 = vpop.f32.mrf.mxu0
  %v1211 = vadd.f32 0.0, %v1210
  %v1212 = vpop.f32.mrf.mxu0
  %v1213 = vadd.f32 0.0, %v1212
  %1214 = vdwg.mxu0
  %v1215 = vmul.f32 %v471, %v1140
  %v1216 = vmul.f32 %v472, %v1142
  %v1217 = vmul.f32 %v473, %v1211
  %v1218 = vmul.f32 %v474, %v1213
  %v1219 = vld [vmem:[%s13] sm:$0xff]
  %v1220 = vld [vmem:[%s13 + $0x8] sm:$0xff]
  %v1221 = vld [vmem:[%s13 + $0x10] sm:$0xff]
  %v1222 = vld [vmem:[%s13 + $0x18] sm:$0xff]
  %v1223 = vld [vmem:[%s13 + $0x20] sm:$0xff]
  %v1224 = vld [vmem:[%s13 + $0x28] sm:$0xff]
  %v1225 = vld [vmem:[%s13 + $0x30] sm:$0xff]
  %v1226 = vld [vmem:[%s13 + $0x38] sm:$0xff]
  %v1227 = vld [vmem:[%s13 + $0x40] sm:$0xff]
  %v1228 = vld [vmem:[%s13 + $0x48] sm:$0xff]
  %v1229 = vld [vmem:[%s13 + $0x50] sm:$0xff]
  %v1230 = vld [vmem:[%s13 + $0x58] sm:$0xff]
  %v1231 = vld [vmem:[%s13 + $0x60] sm:$0xff]
  %v1232 = vld [vmem:[%s13 + $0x68] sm:$0xff]
  %v1233 = vld [vmem:[%s13 + $0x70] sm:$0xff]
  %v1234 = vld [vmem:[%s13 + $0x78] sm:$0xff]
  %v1235 = vld [vmem:[%s13 + $0x80] sm:$0xff]
  %v1236 = vld [vmem:[%s13 + $0x88] sm:$0xff]
  %v1237 = vld [vmem:[%s13 + $0x90] sm:$0xff]
  %v1238 = vld [vmem:[%s13 + $0x98] sm:$0xff]
  %v1239 = vld [vmem:[%s13 + $0xa0] sm:$0xff]
  %v1240 = vld [vmem:[%s13 + $0xa8] sm:$0xff]
  %v1241 = vld [vmem:[%s13 + $0xb0] sm:$0xff]
  %v1242 = vld [vmem:[%s13 + $0xb8] sm:$0xff]
  %v1243 = vld [vmem:[%s13 + $0xc0] sm:$0xff]
  %v1244 = vld [vmem:[%s13 + $0xc8] sm:$0xff]
  %v1245 = vld [vmem:[%s13 + $0xd0] sm:$0xff]
  %v1246 = vld [vmem:[%s13 + $0xd8] sm:$0xff]
  %v1247 = vld [vmem:[%s13 + $0xe0] sm:$0xff]
  %v1248 = vld [vmem:[%s13 + $0xe8] sm:$0xff]
  %v1249 = vld [vmem:[%s13 + $0xf0] sm:$0xff]
  %v1250 = vld [vmem:[%s13 + $0xf8] sm:$0xff]
  %v1251 = vld [vmem:[%s13 + $0x100] sm:$0xff]
  %v1252 = vld [vmem:[%s13 + $0x108] sm:$0xff]
  %v1253 = vld [vmem:[%s13 + $0x110] sm:$0xff]
  %v1254 = vld [vmem:[%s13 + $0x118] sm:$0xff]
  %v1255 = vld [vmem:[%s13 + $0x120] sm:$0xff]
  %v1256 = vld [vmem:[%s13 + $0x128] sm:$0xff]
  %v1257 = vld [vmem:[%s13 + $0x130] sm:$0xff]
  %v1258 = vld [vmem:[%s13 + $0x138] sm:$0xff]
  %v1259 = vld [vmem:[%s13 + $0x140] sm:$0xff]
  %v1260 = vld [vmem:[%s13 + $0x148] sm:$0xff]
  %v1261 = vld [vmem:[%s13 + $0x150] sm:$0xff]
  %v1262 = vld [vmem:[%s13 + $0x158] sm:$0xff]
  %v1263 = vld [vmem:[%s13 + $0x160] sm:$0xff]
  %v1264 = vld [vmem:[%s13 + $0x168] sm:$0xff]
  %v1265 = vld [vmem:[%s13 + $0x170] sm:$0xff]
  %v1266 = vld [vmem:[%s13 + $0x178] sm:$0xff]
  %v1267 = vld [vmem:[%s13 + $0x180] sm:$0xff]
  %v1268 = vld [vmem:[%s13 + $0x188] sm:$0xff]
  %v1269 = vld [vmem:[%s13 + $0x190] sm:$0xff]
  %v1270 = vld [vmem:[%s13 + $0x198] sm:$0xff]
  %v1271 = vld [vmem:[%s13 + $0x1a0] sm:$0xff]
  %v1272 = vld [vmem:[%s13 + $0x1a8] sm:$0xff]
  %v1273 = vld [vmem:[%s13 + $0x1b0] sm:$0xff]
  %v1274 = vld [vmem:[%s13 + $0x1b8] sm:$0xff]
  %v1276 = vsel %vm773, %v1218, 0
  %1278 = vmatprep.subr.mxu0 0.0
  %1279 = vmatpush1.msra.mxu0 %v1234
  %1280 = vmatprep.subr.mxu0 0.0
  %1281 = vmatpush1.msra.mxu0 %v1233
  %1282 = vmatprep.subr.mxu0 0.0
  %1283 = vmatpush1.msra.mxu0 %v1232
  %1284 = vmatprep.subr.mxu0 0.0
  %1285 = vmatpush1.msra.mxu0 %v1231
  %1286 = vmatprep.subr.mxu0 0.0
  %1287 = vmatpush1.msra.mxu0 %v1230
  %1288 = vmatprep.subr.mxu0 0.0
  %1289 = vmatpush1.msra.mxu0 %v1229
  %1290 = vmatprep.subr.mxu0 0.0
  %1291 = vmatpush1.msra.mxu0 %v1228
  %1292 = vmatprep.subr.mxu0 0.0
  %1293 = vmatpush1.msra.mxu0 %v1227
  %1294 = vmatprep.subr.mxu0 0.0
  %1295 = vmatpush1.msra.mxu0 %v1226
  %1296 = vmatprep.subr.mxu0 0.0
  %1297 = vmatpush1.msra.mxu0 %v1225
  %1298 = vmatprep.subr.mxu0 0.0
  %1299 = vmatpush1.msra.mxu0 %v1224
  %1300 = vmatprep.subr.mxu0 0.0
  %1301 = vmatpush1.msra.mxu0 %v1223
  %1302 = vmatprep.subr.mxu0 0.0
  %1303 = vmatpush1.msra.mxu0 %v1222
  %1304 = vmatprep.subr.mxu0 0.0
  %1305 = vmatpush1.msra.mxu0 %v1221
  %1306 = vmatprep.subr.mxu0 0.0
  %1307 = vmatpush1.msra.mxu0 %v1220
  %1308 = vmatprep.subr.mxu0 0.0
  %1309 = vmatpush1.msra.mxu0 %v1219
  %1310 = vmatprep.subr.mxu0 0.0
  %1311 = vmatpush2.msra.mxu0 %v1250
  %1312 = vmatprep.subr.mxu0 0.0
  %1313 = vmatpush2.msra.mxu0 %v1249
  %1314 = vmatprep.subr.mxu0 0.0
  %1315 = vmatpush2.msra.mxu0 %v1248
  %1316 = vmatprep.subr.mxu0 0.0
  %1317 = vmatpush2.msra.mxu0 %v1247
  %1318 = vmatprep.subr.mxu0 0.0
  %1319 = vmatpush2.msra.mxu0 %v1246
  %1320 = vmatprep.subr.mxu0 0.0
  %1321 = vmatpush2.msra.mxu0 %v1245
  %1322 = vmatprep.subr.mxu0 0.0
  %1323 = vmatpush2.msra.mxu0 %v1244
  %1324 = vmatprep.subr.mxu0 0.0
  %1325 = vmatpush2.msra.mxu0 %v1243
  %1326 = vmatprep.subr.mxu0 0.0
  %1327 = vmatpush2.msra.mxu0 %v1242
  %1328 = vmatprep.subr.mxu0 0.0
  %1329 = vmatpush2.msra.mxu0 %v1241
  %1330 = vmatprep.subr.mxu0 0.0
  %1331 = vmatpush2.msra.mxu0 %v1240
  %1332 = vmatprep.subr.mxu0 0.0
  %1333 = vmatpush2.msra.mxu0 %v1239
  %1334 = vmatprep.subr.mxu0 0.0
  %1335 = vmatpush2.msra.mxu0 %v1238
  %1336 = vmatprep.subr.mxu0 0.0
  %1337 = vmatpush2.msra.mxu0 %v1237
  %1338 = vmatprep.subr.mxu0 0.0
  %1339 = vmatpush2.msra.mxu0 %v1236
  %1340 = vmatprep.subr.mxu0 0.0
  %1341 = vmatpush2.msra.mxu0 %v1235
  %1342 = vmatprep.mubr.f32.mxu0 %v1216
  %1343 = vmatmul.mubr.f32.gmra.mxu0 %v1215
  %v1344 = vpop.f32.mrf.mxu0
  %v1345 = vadd.f32 0.0, %v1344
  %v1346 = vpop.f32.mrf.mxu0
  %1347 = vdwg.mxu0
  %1348 = vmatprep.subr.mxu0 0.0
  %1349 = vmatpush1.msra.mxu0 %v1266
  %1350 = vmatprep.subr.mxu0 0.0
  %1351 = vmatpush1.msra.mxu0 %v1265
  %1352 = vmatprep.subr.mxu0 0.0
  %1353 = vmatpush1.msra.mxu0 %v1264
  %1354 = vmatprep.subr.mxu0 0.0
  %1355 = vmatpush1.msra.mxu0 %v1263
  %1356 = vmatprep.subr.mxu0 0.0
  %1357 = vmatpush1.msra.mxu0 %v1262
  %1358 = vmatprep.subr.mxu0 0.0
  %1359 = vmatpush1.msra.mxu0 %v1261
  %1360 = vmatprep.subr.mxu0 0.0
  %1361 = vmatpush1.msra.mxu0 %v1260
  %1362 = vmatprep.subr.mxu0 0.0
  %1363 = vmatpush1.msra.mxu0 %v1259
  %1364 = vmatprep.subr.mxu0 0.0
  %1365 = vmatpush1.msra.mxu0 %v1258
  %1366 = vmatprep.subr.mxu0 0.0
  %1367 = vmatpush1.msra.mxu0 %v1257
  %1368 = vmatprep.subr.mxu0 0.0
  %1369 = vmatpush1.msra.mxu0 %v1256
  %1370 = vmatprep.subr.mxu0 0.0
  %1371 = vmatpush1.msra.mxu0 %v1255
  %1372 = vmatprep.subr.mxu0 0.0
  %1373 = vmatpush1.msra.mxu0 %v1254
  %1374 = vmatprep.subr.mxu0 0.0
  %1375 = vmatpush1.msra.mxu0 %v1253
  %1376 = vmatprep.subr.mxu0 0.0
  %1377 = vmatpush1.msra.mxu0 %v1252
  %1378 = vmatprep.subr.mxu0 0.0
  %1379 = vmatpush1.msra.mxu0 %v1251
  %1380 = vmatprep.subr.mxu0 0.0
  %1381 = vmatpush2.msra.mxu0 0.0
  %1382 = vmatprep.subr.mxu0 0.0
  %1383 = vmatpush2.msra.mxu0 0.0
  %1384 = vmatprep.subr.mxu0 0.0
  %1385 = vmatpush2.msra.mxu0 0.0
  %1386 = vmatprep.subr.mxu0 0.0
  %1387 = vmatpush2.msra.mxu0 0.0
  %1388 = vmatprep.subr.mxu0 0.0
  %1389 = vmatpush2.msra.mxu0 0.0
  %1390 = vmatprep.subr.mxu0 0.0
  %1391 = vmatpush2.msra.mxu0 0.0
  %1392 = vmatprep.subr.mxu0 0.0
  %1393 = vmatpush2.msra.mxu0 0.0
  %1394 = vmatprep.subr.mxu0 0.0
  %1395 = vmatpush2.msra.mxu0 0.0
  %1396 = vmatprep.subr.mxu0 0.0
  %1397 = vmatpush2.msra.mxu0 %v1274
  %1398 = vmatprep.subr.mxu0 0.0
  %1399 = vmatpush2.msra.mxu0 %v1273
  %1400 = vmatprep.subr.mxu0 0.0
  %1401 = vmatpush2.msra.mxu0 %v1272
  %1402 = vmatprep.subr.mxu0 0.0
  %1403 = vmatpush2.msra.mxu0 %v1271
  %1404 = vmatprep.subr.mxu0 0.0
  %1405 = vmatpush2.msra.mxu0 %v1270
  %1406 = vmatprep.subr.mxu0 0.0
  %1407 = vmatpush2.msra.mxu0 %v1269
  %1408 = vmatprep.subr.mxu0 0.0
  %1409 = vmatpush2.msra.mxu0 %v1268
  %1410 = vmatprep.subr.mxu0 0.0
  %1411 = vmatpush2.msra.mxu0 %v1267
  %1412 = vmatprep.mubr.f32.mxu0 %v1276
  %1413 = vmatmul.mubr.f32.gmra.mxu0 %v1217
  %v1414 = vpop.f32.mrf.mxu0
  %v1415 = vadd.f32 %v1345, %v1414
  %v1416 = vpop.f32.mrf.mxu0
  %1417 = vdwg.mxu0
  %v1418 = vld [vmem:[%s14] sm:$0xff]
  %v1419 = vld [vmem:[%s14 + $0x8] sm:$0xff]
  %v1420 = vld [vmem:[%s15] sm:$0xff]
  %v1421 = vld [vmem:[%s15 + $0x8] sm:$0xff]
  %vm1422 = vcmask 130048
  %v1424 = vsel %vm1422, %v1415, 0
  %1426 = vmatprep.subr.mxu0 0.0
  %1427 = vmatpush1.msra.mxu0 0.0
  %1428 = vmatprep.subr.mxu0 0.0
  %1429 = vmatpush1.msra.mxu0 0.0
  %1430 = vmatprep.subr.mxu0 0.0
  %1431 = vmatpush1.msra.mxu0 0.0
  %1432 = vmatprep.subr.mxu0 0.0
  %1433 = vmatpush1.msra.mxu0 0.0
  %1434 = vmatprep.subr.mxu0 0.0
  %1435 = vmatpush1.msra.mxu0 0.0
  %1436 = vmatprep.subr.mxu0 0.0
  %1437 = vmatpush1.msra.mxu0 0.0
  %1438 = vmatprep.subr.mxu0 0.0
  %1439 = vmatpush1.msra.mxu0 0.0
  %1440 = vmatprep.subr.mxu0 0.0
  %1441 = vmatpush1.msra.mxu0 0.0
  %1442 = vmatprep.subr.mxu0 0.0
  %1443 = vmatpush1.msra.mxu0 0.0
  %1444 = vmatprep.subr.mxu0 0.0
  %1445 = vmatpush1.msra.mxu0 0.0
  %1446 = vmatprep.subr.mxu0 0.0
  %1447 = vmatpush1.msra.mxu0 0.0
  %1448 = vmatprep.subr.mxu0 0.0
  %1449 = vmatpush1.msra.mxu0 0.0
  %1450 = vmatprep.subr.mxu0 0.0
  %1451 = vmatpush1.msra.mxu0 0.0
  %1452 = vmatprep.subr.mxu0 0.0
  %1453 = vmatpush1.msra.mxu0 0.0
  %1454 = vmatprep.subr.mxu0 0.0
  %1455 = vmatpush1.msra.mxu0 %v1421
  %1456 = vmatprep.subr.mxu0 0.0
  %1457 = vmatpush1.msra.mxu0 %v1420
  %1458 = vmatprep.subr.mxu0 0.0
  %1459 = vmatpush2.msra.mxu0 0.0
  %1460 = vmatprep.subr.mxu0 0.0
  %1461 = vmatpush2.msra.mxu0 0.0
  %1462 = vmatprep.subr.mxu0 0.0
  %1463 = vmatpush2.msra.mxu0 0.0
  %1464 = vmatprep.subr.mxu0 0.0
  %1465 = vmatpush2.msra.mxu0 0.0
  %1466 = vmatprep.subr.mxu0 0.0
  %1467 = vmatpush2.msra.mxu0 0.0
  %1468 = vmatprep.subr.mxu0 0.0
  %1469 = vmatpush2.msra.mxu0 0.0
  %1470 = vmatprep.subr.mxu0 0.0
  %1471 = vmatpush2.msra.mxu0 0.0
  %1472 = vmatprep.subr.mxu0 0.0
  %1473 = vmatpush2.msra.mxu0 0.0
  %1474 = vmatprep.subr.mxu0 0.0
  %1475 = vmatpush2.msra.mxu0 0.0
  %1476 = vmatprep.subr.mxu0 0.0
  %1477 = vmatpush2.msra.mxu0 0.0
  %1478 = vmatprep.subr.mxu0 0.0
  %1479 = vmatpush2.msra.mxu0 0.0
  %1480 = vmatprep.subr.mxu0 0.0
  %1481 = vmatpush2.msra.mxu0 0.0
  %1482 = vmatprep.subr.mxu0 0.0
  %1483 = vmatpush2.msra.mxu0 0.0
  %1484 = vmatprep.subr.mxu0 0.0
  %1485 = vmatpush2.msra.mxu0 0.0
  %1486 = vmatprep.subr.mxu0 0.0
  %1487 = vmatpush2.msra.mxu0 0.0
  %1488 = vmatprep.subr.mxu0 0.0
  %1489 = vmatpush2.msra.mxu0 0.0
  %1490 = vmatprep.mubr.f32.mxu0 0.0
  %1491 = vmatmul.mubr.f32.gmra.mxu0 %v1424
  %v1492 = vpop.f32.mrf.mxu0
  %v1493 = vadd.f32 0.0, %v1492
  %v1494 = vpop.f32.mrf.mxu0
  %1495 = vdwg.mxu0
  %v1497 = vsel %vm1422, %v648, 0
  %1499 = vmatprep.subr.mxu0 0.0
  %1500 = vmatpush1.msra.mxu0 0.0
  %1501 = vmatprep.subr.mxu0 0.0
  %1502 = vmatpush1.msra.mxu0 0.0
  %1503 = vmatprep.subr.mxu0 0.0
  %1504 = vmatpush1.msra.mxu0 0.0
  %1505 = vmatprep.subr.mxu0 0.0
  %1506 = vmatpush1.msra.mxu0 0.0
  %1507 = vmatprep.subr.mxu0 0.0
  %1508 = vmatpush1.msra.mxu0 0.0
  %1509 = vmatprep.subr.mxu0 0.0
  %1510 = vmatpush1.msra.mxu0 0.0
  %1511 = vmatprep.subr.mxu0 0.0
  %1512 = vmatpush1.msra.mxu0 0.0
  %1513 = vmatprep.subr.mxu0 0.0
  %1514 = vmatpush1.msra.mxu0 0.0
  %1515 = vmatprep.subr.mxu0 0.0
  %1516 = vmatpush1.msra.mxu0 0.0
  %1517 = vmatprep.subr.mxu0 0.0
  %1518 = vmatpush1.msra.mxu0 0.0
  %1519 = vmatprep.subr.mxu0 0.0
  %1520 = vmatpush1.msra.mxu0 0.0
  %1521 = vmatprep.subr.mxu0 0.0
  %1522 = vmatpush1.msra.mxu0 0.0
  %1523 = vmatprep.subr.mxu0 0.0
  %1524 = vmatpush1.msra.mxu0 0.0
  %1525 = vmatprep.subr.mxu0 0.0
  %1526 = vmatpush1.msra.mxu0 0.0
  %1527 = vmatprep.subr.mxu0 0.0
  %1528 = vmatpush1.msra.mxu0 %v1419
  %1529 = vmatprep.subr.mxu0 0.0
  %1530 = vmatpush1.msra.mxu0 %v1418
  %1531 = vmatprep.subr.mxu0 0.0
  %1532 = vmatpush2.msra.mxu0 0.0
  %1533 = vmatprep.subr.mxu0 0.0
  %1534 = vmatpush2.msra.mxu0 0.0
  %1535 = vmatprep.subr.mxu0 0.0
  %1536 = vmatpush2.msra.mxu0 0.0
  %1537 = vmatprep.subr.mxu0 0.0
  %1538 = vmatpush2.msra.mxu0 0.0
  %1539 = vmatprep.subr.mxu0 0.0
  %1540 = vmatpush2.msra.mxu0 0.0
  %1541 = vmatprep.subr.mxu0 0.0
  %1542 = vmatpush2.msra.mxu0 0.0
  %1543 = vmatprep.subr.mxu0 0.0
  %1544 = vmatpush2.msra.mxu0 0.0
  %1545 = vmatprep.subr.mxu0 0.0
  %1546 = vmatpush2.msra.mxu0 0.0
  %1547 = vmatprep.subr.mxu0 0.0
  %1548 = vmatpush2.msra.mxu0 0.0
  %1549 = vmatprep.subr.mxu0 0.0
  %1550 = vmatpush2.msra.mxu0 0.0
  %1551 = vmatprep.subr.mxu0 0.0
  %1552 = vmatpush2.msra.mxu0 0.0
  %1553 = vmatprep.subr.mxu0 0.0
  %1554 = vmatpush2.msra.mxu0 0.0
  %1555 = vmatprep.subr.mxu0 0.0
  %1556 = vmatpush2.msra.mxu0 0.0
  %1557 = vmatprep.subr.mxu0 0.0
  %1558 = vmatpush2.msra.mxu0 0.0
  %1559 = vmatprep.subr.mxu0 0.0
  %1560 = vmatpush2.msra.mxu0 0.0
  %1561 = vmatprep.subr.mxu0 0.0
  %1562 = vmatpush2.msra.mxu0 0.0
  %1563 = vmatprep.mubr.f32.mxu0 0.0
  %1564 = vmatmul.mubr.f32.gmra.mxu0 %v1497
  %v1565 = vpop.f32.mrf.mxu0
  %v1566 = vadd.f32 %v1493, %v1565
  %v1567 = vpop.f32.mrf.mxu0
  %1568 = vdwg.mxu0
  %v1569 = vld [vmem:[#allocation2] sm:$0x1]
  %v1571 = vlaneseq
  %v1572 = vshrl.u32 %v1571, 7
  %v1573 = vsub.s32 0, %v1572
  %v1574 = vrot.slane %v1569, %v1573
  %v1576 = vadd.f32 %v1566, %v1574
  %v1577 = vsub.f32 0.0, %v1576
  %v1578 = vmul.f32 %v1577, 1.442695
  %v1579 = vpow.pop %v1578
  %v1580 = vadd.f32 %v1579, 1.0
  %v1581 = vrcp.pop %v1580
  %vm1582 = vcmask 7168
  %1583 = vst.msk [vmem:[%s17] sm:$0xff] %vm1582, %v1581
  // Predicated region
  $region70: #{tpu_custom_call.1} parent=0 // pred_check
    _
  $region71: #{tpu_custom_call.1} parent=0 // pred_check_branch
    %1585 = sbr.rel (0) target = $region73
  $region72: #{tpu_custom_call.1} parent=0 // pred_region
    _
  $region73: #{tpu_custom_call.1} parent=0 // pred_fallthru
    _
  // Predicated region
  $region74: #{tpu_custom_call.1} parent=0 // pred_check
    _
  $region75: #{tpu_custom_call.1} parent=0 // pred_check_branch
    %1587 = sbr.rel (0) target = $region77
  $region76: #{tpu_custom_call.1} parent=0 // pred_region
    _
  $region77: #{tpu_custom_call.1} parent=0 // pred_fallthru
    _

</llo_original>
